<compile_context>
chip_gen: v5e
topology: v5e:2x2
jax: 0.10.0
libtpu: 0.0.40
codegen_flags: <defaults>
</compile_context>

<pallas_src>
import functools
import numpy as np
import jax
import jax.numpy as jnp
from jax import lax
from jax.experimental import pallas as pl
from jax.experimental.pallas import tpu as pltpu


def _round_up(x, m):
    return (x + m - 1) // m * m


def _cdiv(a, b):
    return -(-a // b)


# ----------------------------- fused kernel -----------------------------
def _wconv1_kernel(feats_ref, w1_ref, b1_ref, w2_ref, b2_ref, g_ref, bt_ref,
                   xm_ref, xh_ref, out_ref, wn_ref, *,
                   inC, outC, k, img_w, G, s_tile, eps):
    # ---- per-sample weight generation: hoisted to the first spatial tile only ----
    @pl.when(pl.program_id(1) == 0)
    def _():
        f = feats_ref[0]                                                     # (1, F) f32
        h = jnp.dot(f, w1_ref[...], preferred_element_type=jnp.float32) + b1_ref[...]
        h = jnp.maximum(h, 0.0)                                              # (1, HIDDEN) f32
        # Single lane-dense second Linear: (1, HIDDEN) @ (HIDDEN, K_pad).
        o = jnp.dot(h, w2_ref[...], preferred_element_type=jnp.float32) + b2_ref[...]
        # Repack (1, K_pad) -> (outC, G).  G columns are ordered (kh, kw, c) (wrapper reorders
        # W2/b2/gamma/beta consistently), so the conv sub-blocks below are contiguous.
        w = jnp.concatenate([o[:, oc * G:(oc + 1) * G] for oc in range(outC)], axis=0)
        # LayerNorm over (inC, k, k) per output channel (f32 stats), then / inC.
        mu = jnp.mean(w, axis=-1, keepdims=True)
        d = w - mu
        var = jnp.mean(d * d, axis=-1, keepdims=True)
        wn = (d * lax.rsqrt(var + eps) * g_ref[...] + bt_ref[...]) * (1.0 / inC)
        wn_ref[...] = wn.astype(wn_ref.dtype)                                # (outC, G) cached

    # ---- per-tile conv: k*k shifted-slab accumulating matmuls ----
    wn = wn_ref[...]                                                         # (outC, G)
    # xx covers flat columns [s*s_tile, (s+1)*s_tile + halo_pad): main tile + halo block.
    xx = jnp.concatenate([xm_ref[0], xh_ref[0]], axis=-1)                    # (inC, s_tile+halo)
    acc = jnp.zeros((outC, s_tile), jnp.float32)
    for kh in range(k):                                                      # static unroll
        for kw in range(k):
            j = kh * k + kw
            off = kh * img_w + kw                                            # static shift
            acc += jnp.dot(wn[:, j * inC:(j + 1) * inC],                     # (outC, inC)
                           xx[:, off:off + s_tile],                          # (inC, s_tile)
                           preferred_element_type=jnp.float32)
    out_ref[0] = acc.astype(out_ref.dtype)


# ----------------------------- wrapper -----------------------------
def wconv1_forward(x, feats, params, *, inC, outC, k, conv_dtype=jnp.float32, s_tile=None):
    """x: (N, inC, H, W) f32, feats: (N, F) f32 -> (N, outC, H-k+1, W-k+1) f32 (padding=0)."""
    N, C, H, W = x.shape
    assert C == inC and feats.shape[0] == N
    Ho, Wo = H - k + 1, W - k + 1
    F = feats.shape[1]
    G = inC * k * k
    K = outC * G
    W1, b1, W2, b2, gamma, beta = params
    HIDDEN = W1.shape[1]

    # ---- one-time layout plumbing (wrapper side) ----
    # Reorder the generated-weight axis (c, kh, kw) -> (kh, kw, c) and lane-pad K to 128.
    K_pad = _round_up(K, 128)
    W2r = W2.reshape(HIDDEN, outC, inC, k, k).transpose(0, 1, 3, 4, 2).reshape(HIDDEN, K)
    W2p = jnp.pad(W2r, ((0, 0), (0, K_pad - K)))
    b2r = b2.reshape(outC, inC, k, k).transpose(0, 2, 3, 1).reshape(1, K)
    b2p = jnp.pad(b2r, ((0, 0), (0, K_pad - K)))
    gr = gamma.reshape(inC, k, k).transpose(1, 2, 0).reshape(1, G)
    br = beta.reshape(inC, k, k).transpose(1, 2, 0).reshape(1, G)
    feats3 = feats.reshape(N, 1, F)

    # ---- spatial tiling on the flattened image (lane-dense, halo-block aligned) ----
    if s_tile is None:
        s_tile = min(2048, _round_up(H * W, 128))
    halo = (k - 1) * W + (k - 1)
    halo_pad = _round_up(max(halo, 1), 128)
    s_tile = _round_up(max(s_tile, halo_pad), halo_pad)      # s_tile % 128 == 0, % halo_pad == 0
    num_s = _cdiv(H * W, s_tile)
    S_out = num_s * s_tile
    L = _round_up(S_out + halo_pad, s_tile)                   # divisible by s_tile and halo_pad

    x_flat = x.reshape(N, inC, H * W).astype(conv_dtype)      # bf16 path: store x bf16 in HBM
    x_pad = jnp.pad(x_flat, ((0, 0), (0, 0), (0, L - H * W)))

    kernel = functools.partial(_wconv1_kernel, inC=inC, outC=outC, k=k, img_w=W,
                               G=G, s_tile=s_tile, eps=1e-5)

    itemsize = jnp.dtype(conv_dtype).itemsize
    flops = 2 * N * (F * HIDDEN + HIDDEN * K) + 2 * N * S_out * outC * G
    bytes_accessed = (4 * (N * F + F * HIDDEN + HIDDEN + HIDDEN * K_pad + K_pad + 2 * G)
                      + itemsize * N * inC * L + 4 * N * outC * S_out)

    out_full = pl.pallas_call(
        kernel,
        out_shape=jax.ShapeDtypeStruct((N, outC, S_out), jnp.float32),
        grid=(N, num_s),
        in_specs=[
            pl.BlockSpec((1, 1, F), lambda n, s: (n, 0, 0)),           # feats (per sample)
            pl.BlockSpec((F, HIDDEN), lambda n, s: (0, 0)),            # W1
            pl.BlockSpec((1, HIDDEN), lambda n, s: (0, 0)),            # b1
            pl.BlockSpec((HIDDEN, K_pad), lambda n, s: (0, 0)),        # W2 (lane-padded)
            pl.BlockSpec((1, K_pad), lambda n, s: (0, 0)),             # b2
            pl.BlockSpec((1, G), lambda n, s: (0, 0)),                 # LayerNorm gamma
            pl.BlockSpec((1, G), lambda n, s: (0, 0)),                 # LayerNorm beta
            pl.BlockSpec((1, inC, s_tile), lambda n, s: (n, 0, s)),    # x main tile window
            pl.BlockSpec((1, inC, halo_pad),                           # x halo window (next 128s)
                         lambda n, s: (n, 0, (s + 1) * (s_tile // halo_pad))),
        ],
        out_specs=pl.BlockSpec((1, outC, s_tile), lambda n, s: (n, 0, s)),
        scratch_shapes=[pltpu.VMEM((outC, G), conv_dtype)],            # cached per-sample weights
        compiler_params=pltpu.CompilerParams(
            dimension_semantics=("parallel", "arbitrary"),
            vmem_limit_bytes=32 * 1024 * 1024),
        cost_estimate=pl.CostEstimate(flops=flops, transcendentals=N * outC,
                                      bytes_accessed=bytes_accessed),
    )(feats3, W1, b1, W2p, b2p, gr, br, x_pad, x_pad)

    # Crop: columns beyond H*W are tile padding; within H*W, positions with ox >= Wo or
    # oy >= Ho are row-wrap junk of the flattened-conv trick -> crop to the VALID output.
    out = out_full[:, :, :H * W].reshape(N, outC, H, W)[:, :, :Ho, :Wo]
    return out


# ---------------- pure-JAX reference (mirrors the PyTorch forward) ----------------
def wconv1_reference(x, feats, params, *, inC, outC, k):
    W1, b1, W2, b2, gamma, beta = params
    N = x.shape[0]
    h = jnp.maximum(feats @ W1 + b1, 0.0)
    wflat = h @ W2 + b2
    w = wflat.reshape(N, outC, inC, k, k)
    mu = jnp.mean(w, axis=(2, 3, 4), keepdims=True)
    var = jnp.mean((w - mu) ** 2, axis=(2, 3, 4), keepdims=True)
    g = gamma.reshape(1, 1, inC, k, k)
    b = beta.reshape(1, 1, inC, k, k)
    wn = (w - mu) / jnp.sqrt(var + 1e-5) * g + b
    wn = wn / inC
    outs = [
        lax.conv_general_dilated(
            x[i:i + 1], wn[i], window_strides=(1, 1), padding="VALID",
            dimension_numbers=("NCHW", "OIHW", "NCHW"))
        for i in range(N)
    ]
    return jnp.concatenate(outs, axis=0)


if __name__ == "__main__":
    # Small shapes consistent with the module: Feature_num=8, inC=4, outC=3, k=3, padding=0
    N, F, inC, outC, k, H, W = 2, 8, 4, 3, 3, 16, 16
    K = outC * inC * k * k
    G = inC * k * k

    key = jax.random.PRNGKey(0)
    ks = jax.random.split(key, 8)
    W1 = 0.2 * jax.random.normal(ks[0], (F, 256), jnp.float32)
    b1 = 0.1 * jax.random.normal(ks[1], (1, 256), jnp.float32)
    W2 = 0.05 * jax.random.normal(ks[2], (256, K), jnp.float32)
    b2 = 0.1 * jax.random.normal(ks[3], (1, K), jnp.float32)
    gamma = 1.0 + 0.1 * jax.random.normal(ks[4], (1, G), jnp.float32)  # LN weight, flat (inC,k,k)
    beta = 0.1 * jax.random.normal(ks[5], (1, G), jnp.float32)         # LN bias
    params = (W1, b1, W2, b2, gamma, beta)

    x = jax.random.normal(ks[6], (N, inC, H, W), jnp.float32)
    feats = jax.random.normal(ks[7], (N, F), jnp.float32)

    ref = jax.block_until_ready(wconv1_reference(x, feats, params, inC=inC, outC=outC, k=k))

    # f32 path: matches the PyTorch/f32 reference tightly.
    out = jax.block_until_ready(wconv1_forward(x, feats, params, inC=inC, outC=outC, k=k))
    np.testing.assert_allclose(np.asarray(out), np.asarray(ref), rtol=1e-4, atol=1e-4)

    # bf16 path (x stored bf16 in HBM, generated conv weights held bf16; MLP/LN stay f32).
    # NOTE: this quantizes the generated conv weights themselves -> looser tolerance.
    out_bf16 = jax.block_until_ready(
        wconv1_forward(x, feats, params, inC=inC, outC=outC, k=k, conv_dtype=jnp.bfloat16))
    np.testing.assert_allclose(np.asarray(out_bf16), np.asarray(ref), rtol=5e-2, atol=5e-2)

    print("KERNEL_OK")
</pallas_src>

<mosaic_0001>
module attributes {stable_mosaic.version = 11 : i64} {
  func.func @_wconv1_kernel(%arg0: i32, %arg1: i32, %arg2: memref<1x1x8xf32, #tpu.memory_space<vmem>>, %arg3: memref<8x256xf32, #tpu.memory_space<vmem>>, %arg4: memref<1x256xf32, #tpu.memory_space<vmem>>, %arg5: memref<256x128xf32, #tpu.memory_space<vmem>>, %arg6: memref<1x128xf32, #tpu.memory_space<vmem>>, %arg7: memref<1x36xf32, #tpu.memory_space<vmem>>, %arg8: memref<1x36xf32, #tpu.memory_space<vmem>>, %arg9: memref<1x4x256xf32, #tpu.memory_space<vmem>>, %arg10: memref<1x4x128xf32, #tpu.memory_space<vmem>>, %arg11: memref<1x3x256xf32, #tpu.memory_space<vmem>>, %arg12: memref<3x36xf32, #tpu.memory_space<vmem>>) attributes {dimension_semantics = [#tpu.dimension_semantics<parallel>, #tpu.dimension_semantics<arbitrary>], iteration_bounds = array<i64: 2, 1>, scalar_prefetch = 0 : i64, scratch_operands = 1 : i64, tpu.core_type = #tpu.core_type<tc>, window_params = [{transform_indices = @transform_0, window_bounds = array<i64: 1, 1, 8>}, {pipeline_mode = #tpu.pipeline_mode<synchronous>, transform_indices = @transform_1, window_bounds = array<i64: 8, 256>}, {pipeline_mode = #tpu.pipeline_mode<synchronous>, transform_indices = @transform_2, window_bounds = array<i64: 1, 256>}, {pipeline_mode = #tpu.pipeline_mode<synchronous>, transform_indices = @transform_3, window_bounds = array<i64: 256, 128>}, {pipeline_mode = #tpu.pipeline_mode<synchronous>, transform_indices = @transform_4, window_bounds = array<i64: 1, 128>}, {pipeline_mode = #tpu.pipeline_mode<synchronous>, transform_indices = @transform_5, window_bounds = array<i64: 1, 36>}, {pipeline_mode = #tpu.pipeline_mode<synchronous>, transform_indices = @transform_6, window_bounds = array<i64: 1, 36>}, {transform_indices = @transform_7, window_bounds = array<i64: 1, 4, 256>}, {transform_indices = @transform_8, window_bounds = array<i64: 1, 4, 128>}, {transform_indices = @transform_9, window_bounds = array<i64: 1, 3, 256>}]} {
    %c0_i32 = arith.constant 0 : i32
    %0 = arith.cmpi eq, %arg1, %c0_i32 : i32
    %1 = arith.extui %0 : i1 to i32
    %c0_i32_0 = arith.constant 0 : i32
    %2 = arith.cmpi ne, %1, %c0_i32_0 : i32
    scf.if %2 {
      %c0_20 = arith.constant 0 : index
      %c0_21 = arith.constant 0 : index
      %c0_22 = arith.constant 0 : index
      %49 = vector.load %arg2[%c0_20, %c0_21, %c0_22] : memref<1x1x8xf32, #tpu.memory_space<vmem>>, vector<1x1x8xf32>
      %50 = vector.shape_cast %49 : vector<1x1x8xf32> to vector<1x8xf32>
      %c0_23 = arith.constant 0 : index
      %c0_24 = arith.constant 0 : index
      %51 = vector.load %arg3[%c0_23, %c0_24] : memref<8x256xf32, #tpu.memory_space<vmem>>, vector<8x256xf32>
      %cst_25 = arith.constant dense<0.000000e+00> : vector<1x256xf32>
      %52 = tpu.matmul %50, %51, %cst_25 {dimension_numbers = #tpu.dot_dimension_numbers<[1], [0], [0], [1], [0, 0, 1, 1], [], []>} : vector<1x8xf32>, vector<8x256xf32>, vector<1x256xf32> -> vector<1x256xf32>
      %c0_26 = arith.constant 0 : index
      %c0_27 = arith.constant 0 : index
      %53 = vector.load %arg4[%c0_26, %c0_27] : memref<1x256xf32, #tpu.memory_space<vmem>>, vector<1x256xf32>
      %54 = arith.addf %52, %53 : vector<1x256xf32>
      %cst_28 = arith.constant 0.000000e+00 : f32
      %55 = vector.broadcast %cst_28 : f32 to vector<1x256xf32>
      %56 = arith.maximumf %54, %55 : vector<1x256xf32>
      %c0_29 = arith.constant 0 : index
      %c0_30 = arith.constant 0 : index
      %57 = vector.load %arg5[%c0_29, %c0_30] : memref<256x128xf32, #tpu.memory_space<vmem>>, vector<256x128xf32>
      %cst_31 = arith.constant dense<0.000000e+00> : vector<1x128xf32>
      %58 = tpu.matmul %56, %57, %cst_31 {dimension_numbers = #tpu.dot_dimension_numbers<[1], [0], [0], [1], [0, 0, 1, 1], [], []>} : vector<1x256xf32>, vector<256x128xf32>, vector<1x128xf32> -> vector<1x128xf32>
      %c0_32 = arith.constant 0 : index
      %c0_33 = arith.constant 0 : index
      %59 = vector.load %arg6[%c0_32, %c0_33] : memref<1x128xf32, #tpu.memory_space<vmem>>, vector<1x128xf32>
      %60 = arith.addf %58, %59 : vector<1x128xf32>
      %61 = vector.extract_strided_slice %60 {offsets = [0, 0], sizes = [1, 36], strides = [1, 1]} : vector<1x128xf32> to vector<1x36xf32>
      %62 = vector.extract_strided_slice %60 {offsets = [0, 36], sizes = [1, 36], strides = [1, 1]} : vector<1x128xf32> to vector<1x36xf32>
      %63 = vector.extract_strided_slice %60 {offsets = [0, 72], sizes = [1, 36], strides = [1, 1]} : vector<1x128xf32> to vector<1x36xf32>
      %64 = tpu.concatenate %61, %62, %63 in 0 : vector<1x36xf32>, vector<1x36xf32>, vector<1x36xf32> -> vector<3x36xf32>
      %cst_34 = arith.constant dense<0.000000e+00> : vector<3xf32>
      %65 = vector.multi_reduction <add>, %64, %cst_34 [1] : vector<3x36xf32> to vector<3xf32>
      %66 = vector.shape_cast %65 : vector<3xf32> to vector<3x1xf32>
      %cst_35 = arith.constant 3.600000e+01 : f32
      %67 = vector.broadcast %cst_35 : f32 to vector<3x1xf32>
      %68 = arith.divf %66, %67 : vector<3x1xf32>
      %69 = vector.broadcast %68 : vector<3x1xf32> to vector<3x36xf32>
      %70 = arith.subf %64, %69 : vector<3x36xf32>
      %71 = arith.mulf %70, %70 : vector<3x36xf32>
      %cst_36 = arith.constant dense<0.000000e+00> : vector<3xf32>
      %72 = vector.multi_reduction <add>, %71, %cst_36 [1] : vector<3x36xf32> to vector<3xf32>
      %73 = vector.shape_cast %72 : vector<3xf32> to vector<3x1xf32>
      %cst_37 = arith.constant 3.600000e+01 : f32
      %74 = vector.broadcast %cst_37 : f32 to vector<3x1xf32>
      %75 = arith.divf %73, %74 : vector<3x1xf32>
      %cst_38 = arith.constant 9.99999974E-6 : f32
      %76 = vector.broadcast %cst_38 : f32 to vector<3x1xf32>
      %77 = arith.addf %75, %76 : vector<3x1xf32>
      %78 = math.rsqrt %77 : vector<3x1xf32>
      %79 = vector.broadcast %78 : vector<3x1xf32> to vector<3x36xf32>
      %80 = arith.mulf %70, %79 : vector<3x36xf32>
      %c0_39 = arith.constant 0 : index
      %c0_40 = arith.constant 0 : index
      %81 = vector.load %arg7[%c0_39, %c0_40] : memref<1x36xf32, #tpu.memory_space<vmem>>, vector<1x36xf32>
      %82 = vector.broadcast %81 : vector<1x36xf32> to vector<3x36xf32>
      %83 = arith.mulf %80, %82 : vector<3x36xf32>
      %c0_41 = arith.constant 0 : index
      %c0_42 = arith.constant 0 : index
      %84 = vector.load %arg8[%c0_41, %c0_42] : memref<1x36xf32, #tpu.memory_space<vmem>>, vector<1x36xf32>
      %85 = vector.broadcast %84 : vector<1x36xf32> to vector<3x36xf32>
      %86 = arith.addf %83, %85 : vector<3x36xf32>
      %cst_43 = arith.constant 2.500000e-01 : f32
      %87 = vector.broadcast %cst_43 : f32 to vector<3x36xf32>
      %88 = arith.mulf %86, %87 : vector<3x36xf32>
      %c0_44 = arith.constant 0 : index
      %c0_45 = arith.constant 0 : index
      %89 = vector.load %arg12[%c0_44, %c0_45] : memref<3x36xf32, #tpu.memory_space<vmem>>, vector<3x36xf32>
      tpu.vector_store %arg12[%c0_44, %c0_45], %88 {strides = array<i32>} : memref<3x36xf32, #tpu.memory_space<vmem>>, vector<3x36xf32>,
    } else {
    }
    %c0 = arith.constant 0 : index
    %c0_1 = arith.constant 0 : index
    %3 = vector.load %arg12[%c0, %c0_1] : memref<3x36xf32, #tpu.memory_space<vmem>>, vector<3x36xf32>
    %c0_2 = arith.constant 0 : index
    %c0_3 = arith.constant 0 : index
    %c0_4 = arith.constant 0 : index
    %4 = vector.load %arg9[%c0_2, %c0_3, %c0_4] : memref<1x4x256xf32, #tpu.memory_space<vmem>>, vector<1x4x256xf32>
    %5 = vector.shape_cast %4 : vector<1x4x256xf32> to vector<4x256xf32>
    %c0_5 = arith.constant 0 : index
    %c0_6 = arith.constant 0 : index
    %c0_7 = arith.constant 0 : index
    %6 = vector.load %arg10[%c0_5, %c0_6, %c0_7] : memref<1x4x128xf32, #tpu.memory_space<vmem>>, vector<1x4x128xf32>
    %7 = vector.shape_cast %6 : vector<1x4x128xf32> to vector<4x128xf32>
    %8 = tpu.concatenate %5, %7 in 1 : vector<4x256xf32>, vector<4x128xf32> -> vector<4x384xf32>
    %cst = arith.constant 0.000000e+00 : f32
    %9 = vector.broadcast %cst : f32 to vector<3x256xf32>
    %10 = vector.extract_strided_slice %3 {offsets = [0, 0], sizes = [3, 4], strides = [1, 1]} : vector<3x36xf32> to vector<3x4xf32>
    %11 = vector.extract_strided_slice %8 {offsets = [0, 0], sizes = [4, 256], strides = [1, 1]} : vector<4x384xf32> to vector<4x256xf32>
    %cst_8 = arith.constant dense<0.000000e+00> : vector<3x256xf32>
    %12 = tpu.matmul %10, %11, %cst_8 {dimension_numbers = #tpu.dot_dimension_numbers<[1], [0], [0], [1], [0, 0, 1, 1], [], []>} : vector<3x4xf32>, vector<4x256xf32>, vector<3x256xf32> -> vector<3x256xf32>
    %13 = arith.addf %9, %12 : vector<3x256xf32>
    %14 = vector.extract_strided_slice %3 {offsets = [0, 4], sizes = [3, 4], strides = [1, 1]} : vector<3x36xf32> to vector<3x4xf32>
    %15 = vector.extract_strided_slice %8 {offsets = [0, 1], sizes = [4, 256], strides = [1, 1]} : vector<4x384xf32> to vector<4x256xf32>
    %cst_9 = arith.constant dense<0.000000e+00> : vector<3x256xf32>
    %16 = tpu.matmul %14, %15, %cst_9 {dimension_numbers = #tpu.dot_dimension_numbers<[1], [0], [0], [1], [0, 0, 1, 1], [], []>} : vector<3x4xf32>, vector<4x256xf32>, vector<3x256xf32> -> vector<3x256xf32>
    %17 = arith.addf %13, %16 : vector<3x256xf32>
    %18 = vector.extract_strided_slice %3 {offsets = [0, 8], sizes = [3, 4], strides = [1, 1]} : vector<3x36xf32> to vector<3x4xf32>
    %19 = vector.extract_strided_slice %8 {offsets = [0, 2], sizes = [4, 256], strides = [1, 1]} : vector<4x384xf32> to vector<4x256xf32>
    %cst_10 = arith.constant dense<0.000000e+00> : vector<3x256xf32>
    %20 = tpu.matmul %18, %19, %cst_10 {dimension_numbers = #tpu.dot_dimension_numbers<[1], [0], [0], [1], [0, 0, 1, 1], [], []>} : vector<3x4xf32>, vector<4x256xf32>, vector<3x256xf32> -> vector<3x256xf32>
    %21 = arith.addf %17, %20 : vector<3x256xf32>
    %22 = vector.extract_strided_slice %3 {offsets = [0, 12], sizes = [3, 4], strides = [1, 1]} : vector<3x36xf32> to vector<3x4xf32>
    %23 = vector.extract_strided_slice %8 {offsets = [0, 16], sizes = [4, 256], strides = [1, 1]} : vector<4x384xf32> to vector<4x256xf32>
    %cst_11 = arith.constant dense<0.000000e+00> : vector<3x256xf32>
    %24 = tpu.matmul %22, %23, %cst_11 {dimension_numbers = #tpu.dot_dimension_numbers<[1], [0], [0], [1], [0, 0, 1, 1], [], []>} : vector<3x4xf32>, vector<4x256xf32>, vector<3x256xf32> -> vector<3x256xf32>
    %25 = arith.addf %21, %24 : vector<3x256xf32>
    %26 = vector.extract_strided_slice %3 {offsets = [0, 16], sizes = [3, 4], strides = [1, 1]} : vector<3x36xf32> to vector<3x4xf32>
    %27 = vector.extract_strided_slice %8 {offsets = [0, 17], sizes = [4, 256], strides = [1, 1]} : vector<4x384xf32> to vector<4x256xf32>
    %cst_12 = arith.constant dense<0.000000e+00> : vector<3x256xf32>
    %28 = tpu.matmul %26, %27, %cst_12 {dimension_numbers = #tpu.dot_dimension_numbers<[1], [0], [0], [1], [0, 0, 1, 1], [], []>} : vector<3x4xf32>, vector<4x256xf32>, vector<3x256xf32> -> vector<3x256xf32>
    %29 = arith.addf %25, %28 : vector<3x256xf32>
    %30 = vector.extract_strided_slice %3 {offsets = [0, 20], sizes = [3, 4], strides = [1, 1]} : vector<3x36xf32> to vector<3x4xf32>
    %31 = vector.extract_strided_slice %8 {offsets = [0, 18], sizes = [4, 256], strides = [1, 1]} : vector<4x384xf32> to vector<4x256xf32>
    %cst_13 = arith.constant dense<0.000000e+00> : vector<3x256xf32>
    %32 = tpu.matmul %30, %31, %cst_13 {dimension_numbers = #tpu.dot_dimension_numbers<[1], [0], [0], [1], [0, 0, 1, 1], [], []>} : vector<3x4xf32>, vector<4x256xf32>, vector<3x256xf32> -> vector<3x256xf32>
    %33 = arith.addf %29, %32 : vector<3x256xf32>
    %34 = vector.extract_strided_slice %3 {offsets = [0, 24], sizes = [3, 4], strides = [1, 1]} : vector<3x36xf32> to vector<3x4xf32>
    %35 = vector.extract_strided_slice %8 {offsets = [0, 32], sizes = [4, 256], strides = [1, 1]} : vector<4x384xf32> to vector<4x256xf32>
    %cst_14 = arith.constant dense<0.000000e+00> : vector<3x256xf32>
    %36 = tpu.matmul %34, %35, %cst_14 {dimension_numbers = #tpu.dot_dimension_numbers<[1], [0], [0], [1], [0, 0, 1, 1], [], []>} : vector<3x4xf32>, vector<4x256xf32>, vector<3x256xf32> -> vector<3x256xf32>
    %37 = arith.addf %33, %36 : vector<3x256xf32>
    %38 = vector.extract_strided_slice %3 {offsets = [0, 28], sizes = [3, 4], strides = [1, 1]} : vector<3x36xf32> to vector<3x4xf32>
    %39 = vector.extract_strided_slice %8 {offsets = [0, 33], sizes = [4, 256], strides = [1, 1]} : vector<4x384xf32> to vector<4x256xf32>
    %cst_15 = arith.constant dense<0.000000e+00> : vector<3x256xf32>
    %40 = tpu.matmul %38, %39, %cst_15 {dimension_numbers = #tpu.dot_dimension_numbers<[1], [0], [0], [1], [0, 0, 1, 1], [], []>} : vector<3x4xf32>, vector<4x256xf32>, vector<3x256xf32> -> vector<3x256xf32>
    %41 = arith.addf %37, %40 : vector<3x256xf32>
    %42 = vector.extract_strided_slice %3 {offsets = [0, 32], sizes = [3, 4], strides = [1, 1]} : vector<3x36xf32> to vector<3x4xf32>
    %43 = vector.extract_strided_slice %8 {offsets = [0, 34], sizes = [4, 256], strides = [1, 1]} : vector<4x384xf32> to vector<4x256xf32>
    %cst_16 = arith.constant dense<0.000000e+00> : vector<3x256xf32>
    %44 = tpu.matmul %42, %43, %cst_16 {dimension_numbers = #tpu.dot_dimension_numbers<[1], [0], [0], [1], [0, 0, 1, 1], [], []>} : vector<3x4xf32>, vector<4x256xf32>, vector<3x256xf32> -> vector<3x256xf32>
    %45 = arith.addf %41, %44 : vector<3x256xf32>
    %c0_17 = arith.constant 0 : index
    %c0_18 = arith.constant 0 : index
    %c0_19 = arith.constant 0 : index
    %46 = vector.load %arg11[%c0_17, %c0_18, %c0_19] : memref<1x3x256xf32, #tpu.memory_space<vmem>>, vector<1x3x256xf32>
    %47 = vector.shape_cast %46 : vector<1x3x256xf32> to vector<3x256xf32>
    %48 = vector.shape_cast %45 : vector<3x256xf32> to vector<1x3x256xf32>
    tpu.vector_store %arg11[%c0_17, %c0_18, %c0_19], %48 {strides = array<i32>} : memref<1x3x256xf32, #tpu.memory_space<vmem>>, vector<1x3x256xf32>,
    return
  }
  func.func @transform_0(%arg0: i32, %arg1: i32) -> (i32, i32, i32) {
    %c0_i32 = arith.constant 0 : i32
    %c0_i32_0 = arith.constant 0 : i32
    %c0_i32_1 = arith.constant 0 : i32
    return %arg0, %c0_i32, %c0_i32_0 : i32, i32, i32
  }
  func.func @transform_1(%arg0: i32, %arg1: i32) -> (i32, i32) {
    %c0_i32 = arith.constant 0 : i32
    %c0_i32_0 = arith.constant 0 : i32
    %c0_i32_1 = arith.constant 0 : i32
    return %c0_i32, %c0_i32_0 : i32, i32
  }
  func.func @transform_2(%arg0: i32, %arg1: i32) -> (i32, i32) {
    %c0_i32 = arith.constant 0 : i32
    %c0_i32_0 = arith.constant 0 : i32
    %c0_i32_1 = arith.constant 0 : i32
    return %c0_i32, %c0_i32_0 : i32, i32
  }
  func.func @transform_3(%arg0: i32, %arg1: i32) -> (i32, i32) {
    %c0_i32 = arith.constant 0 : i32
    %c0_i32_0 = arith.constant 0 : i32
    %c0_i32_1 = arith.constant 0 : i32
    return %c0_i32, %c0_i32_0 : i32, i32
  }
  func.func @transform_4(%arg0: i32, %arg1: i32) -> (i32, i32) {
    %c0_i32 = arith.constant 0 : i32
    %c0_i32_0 = arith.constant 0 : i32
    %c0_i32_1 = arith.constant 0 : i32
    return %c0_i32, %c0_i32_0 : i32, i32
  }
  func.func @transform_5(%arg0: i32, %arg1: i32) -> (i32, i32) {
    %c0_i32 = arith.constant 0 : i32
    %c0_i32_0 = arith.constant 0 : i32
    %c0_i32_1 = arith.constant 0 : i32
    return %c0_i32, %c0_i32_0 : i32, i32
  }
  func.func @transform_6(%arg0: i32, %arg1: i32) -> (i32, i32) {
    %c0_i32 = arith.constant 0 : i32
    %c0_i32_0 = arith.constant 0 : i32
    %c0_i32_1 = arith.constant 0 : i32
    return %c0_i32, %c0_i32_0 : i32, i32
  }
  func.func @transform_7(%arg0: i32, %arg1: i32) -> (i32, i32, i32) {
    %c0_i32 = arith.constant 0 : i32
    %c0_i32_0 = arith.constant 0 : i32
    return %arg0, %c0_i32, %arg1 : i32, i32, i32
  }
  func.func @transform_8(%arg0: i32, %arg1: i32) -> (i32, i32, i32) {
    %c1_i32 = arith.constant 1 : i32
    %0 = arith.addi %arg1, %c1_i32 : i32
    %c2_i32 = arith.constant 2 : i32
    %1 = arith.muli %0, %c2_i32 : i32
    %c0_i32 = arith.constant 0 : i32
    %c0_i32_0 = arith.constant 0 : i32
    return %arg0, %c0_i32, %1 : i32, i32, i32
  }
  func.func @transform_9(%arg0: i32, %arg1: i32) -> (i32, i32, i32) {
    %c0_i32 = arith.constant 0 : i32
    %c0_i32_0 = arith.constant 0 : i32
    return %arg0, %c0_i32, %arg1 : i32, i32, i32
  }
}

</mosaic_0001>

<llo_original>
// kernel: tpu_custom_call.1
$region0: #{tpu_custom_call.1}
  #allocation0 [shape = 'u32[]', space=smem, size = 0x4, offset = 0x4, fixed_abs, tag = 'smem constant byte address 0x4 - core index']
  #allocation1 [shape = 'u32[72,128]{1,0:T(1,128)}', space=vmem, size = 0x9000, scoped, tag = 'internal scratch']
  #allocation2 [shape = 'f32[3,36]{1,0:T(4,128)}', space=vmem, size = 0x800, scoped, tag = 'scratch operand']
  %s0 = inlined_call_operand.hbm [shape: f32[2,1,8], index: 0, kind: input, shape index: {}]
  %s1 = inlined_call_operand.hbm [shape: f32[8,256], index: 1, kind: input, shape index: {}]
  %s2 = inlined_call_operand.hbm [shape: f32[1,256], index: 2, kind: input, shape index: {}]
  %s3 = inlined_call_operand.hbm [shape: f32[256,128], index: 3, kind: input, shape index: {}]
  %s4 = inlined_call_operand.vmem [shape: f32[1,128], index: 4, kind: input, shape index: {}]
  %s5 = inlined_call_operand.vmem [shape: f32[1,36], index: 5, kind: input, shape index: {}]
  %s6 = inlined_call_operand.vmem [shape: f32[1,36], index: 6, kind: input, shape index: {}]
  %s7 = inlined_call_operand.hbm [shape: f32[2,4,512], index: 7, kind: input, shape index: {}]
  %s8 = inlined_call_operand.hbm [shape: f32[2,4,512], index: 8, kind: input, shape index: {}]
  %s9 = inlined_call_operand.vmem [shape: f32[2,3,256], index: 9, kind: output, shape index: {}]
  %s10 = sld [smem:[#allocation0]]
  $region97: #{tpu_custom_call.1} parent=0
    _
  %s12 = ssub.s32 1, %s10
  %s13 = scalar_select 0, %s12, %s10
  $region1: #{tpu_custom_call.1} parent=0
    #allocation3 [shape = 'u8[1024]{0}', space=vmem, size = 0x400, scoped, tag = 'input window, operand 0']
    #allocation4 [shape = 's32[2]{0}', space=sflag, size = 0x8, scoped, tag = 'scoped memory for tpu_custom_call.1']
    #allocation5 [shape = 'u8[8192]{0}', space=vmem, size = 0x2000, scoped, tag = 'input window, operand 1, single buffered']
    #allocation6 [shape = 's32[1]{0}', space=sflag, size = 0x4, scoped, tag = 'scoped memory for tpu_custom_call.1']
    #allocation7 [shape = 'u8[1024]{0}', space=vmem, size = 0x400, scoped, tag = 'input window, operand 2, single buffered']
    #allocation8 [shape = 'u8[131072]{0}', space=vmem, size = 0x20000, scoped, tag = 'input window, operand 3, single buffered']
    #allocation9 [shape = 's32[1]{0}', space=sflag, size = 0x4, scoped, tag = 'scoped memory for tpu_custom_call.1']
    #allocation10 [shape = 'u8[8192]{0}', space=vmem, size = 0x2000, scoped, tag = 'input window, operand 7']
    #allocation11 [shape = 'u8[4096]{0}', space=vmem, size = 0x1000, scoped, tag = 'input window, operand 8']
    %14 = vsyncpa [#allocation4], 0
    %s15 = scalar_lea.sflag [#allocation4], 1
    %16 = vsyncpa %s15, 0
    %17 = vsyncpa [#allocation6], 0
    %18 = vsyncpa [#allocation9], 0
    loop: start=0, step=1, limit=4
    $region2: #{tpu_custom_call.1} parent=1 // loop_pre_header
      _
    $region3: #{tpu_custom_call.1} parent=1 // loop_header
      %s20 = sphi 0, %s24
      %p21 = scmp.ge.s32.totalorder %s20, 4
      %s27 = sphi 0, %s39
      %s28 = sphi 0, %s35
      %s29 = sphi 0, %s27
      %s30 = sphi 0, %s28
      %s31 = sphi 0, %s29
      %s32 = sphi 0, %s30
      %s42 = sphi 0, %s44
      %s45 = sphi 0, %s42
      %s46 = sphi 0, %s45
      %s62 = sphi 0, %s46
      %s66 = sphi 0, %s66
      %s68 = sphi 0, %s66
      %s69 = sphi 0, %s68
      %s83 = sphi 0, %s69
      %s87 = sphi 0, %s87
      %s89 = sphi 0, %s87
      %s90 = sphi 0, %s89
      %s104 = sphi 0, %s90
      %s108 = sphi 0, %s108
      %s110 = sphi 0, %s108
      %s111 = sphi 0, %s110
      %s125 = sphi 0, %s111
      %s129 = sphi 0, %s129
      %s131 = sphi 0, %s129
      %s132 = sphi 0, %s131
      %s146 = sphi 0, %s132
      %s150 = sphi 0, %s150
      %s152 = sphi 0, %s150
      %s153 = sphi 0, %s152
      %s167 = sphi 0, %s153
      %s171 = sphi 0, %s171
      %s173 = sphi 0, %s171
      %s174 = sphi 0, %s173
      %s188 = sphi 0, %s174
      %s196 = sphi 0, %s198
      %s199 = sphi 0, %s196
      %s200 = sphi 0, %s199
      %s216 = sphi 0, %s200
      %s228 = sphi 0, %s230
      %s231 = sphi 0, %s228
      %s232 = sphi 0, %s231
      %s248 = sphi 0, %s232
      %s256 = sphi 0, %s258
      %s259 = sphi 0, %s256
      %s260 = sphi 0, %s259
      %s276 = sphi 0, %s260
    $region4: #{tpu_custom_call.1} parent=1 // loop_header_branch
      %23 = sbr.rel (%p21) target = $region8
    $region5: #{tpu_custom_call.1} parent=1 // loop_body
      %s25 = ssub.s32 %s20, 1
      %s26 = ssub.s32 %s20, 2
      %s33 = sadd.s32 1, %s28
      %p34 = scmp.ge.s32.totalorder %s33, 1
      %s35 = scalar_select %p34, 0, %s33
      %s36 = sadd.s32 1, %s27
      %s37 = scalar_select %p34, %s36, %s27
      %p38 = scmp.ge.s32.totalorder %s37, 2
      %s39 = scalar_select %p38, 0, %s37
      %s40 = ssub.s32 %s27, %s39
      %p41 = scmp.eq.s32.totalorder %s40, 0
      %s43 = sadd.s32 %s42, 1
      %s44 = scalar_select %p41, %s42, %s43
      %p47 = pneg %p41
      %p48 = scmp.eq.s32.totalorder %s20, 1
      %p49 = por %p47, %p48
      %p50 = scmp.ne.s32.totalorder %s42, %s45
      %p51 = scmp.eq.s32.totalorder %s20, 0
      %p52 = por %p50, %p51
      %p53 = scmp.ne.s32.totalorder %s42, %s45
      %p54 = scmp.eq.s32.totalorder %s25, 1
      %p55 = por %p53, %p54
      %p56 = scmp.ne.s32.totalorder %s45, %s46
      %p57 = scmp.eq.s32.totalorder %s25, 0
      %p58 = por %p56, %p57
      %p59 = scmp.ne.s32.totalorder %s45, %s46
      %p60 = scmp.eq.s32.totalorder %s26, 1
      %p61 = por %p59, %p60
      %p63 = scmp.ne.s32.totalorder %s46, %s62
      %p64 = scmp.eq.s32.totalorder %s26, 0
      %p65 = por %p63, %p64
      %s67 = sadd.s32 %s66, 1
      %p70 = scmp.eq.s32.totalorder %s20, 1
      %p71 = scmp.ne.s32.totalorder %s66, %s68
      %p72 = scmp.eq.s32.totalorder %s20, 0
      %p73 = por %p71, %p72
      %p74 = scmp.ne.s32.totalorder %s66, %s68
      %p75 = scmp.eq.s32.totalorder %s25, 1
      %p76 = por %p74, %p75
      %p77 = scmp.ne.s32.totalorder %s68, %s69
      %p78 = scmp.eq.s32.totalorder %s25, 0
      %p79 = por %p77, %p78
      %p80 = scmp.ne.s32.totalorder %s68, %s69
      %p81 = scmp.eq.s32.totalorder %s26, 1
      %p82 = por %p80, %p81
      %p84 = scmp.ne.s32.totalorder %s69, %s83
      %p85 = scmp.eq.s32.totalorder %s26, 0
      %p86 = por %p84, %p85
      %s88 = sadd.s32 %s87, 1
      %p91 = scmp.eq.s32.totalorder %s20, 1
      %p92 = scmp.ne.s32.totalorder %s87, %s89
      %p93 = scmp.eq.s32.totalorder %s20, 0
      %p94 = por %p92, %p93
      %p95 = scmp.ne.s32.totalorder %s87, %s89
      %p96 = scmp.eq.s32.totalorder %s25, 1
      %p97 = por %p95, %p96
      %p98 = scmp.ne.s32.totalorder %s89, %s90
      %p99 = scmp.eq.s32.totalorder %s25, 0
      %p100 = por %p98, %p99
      %p101 = scmp.ne.s32.totalorder %s89, %s90
      %p102 = scmp.eq.s32.totalorder %s26, 1
      %p103 = por %p101, %p102
      %p105 = scmp.ne.s32.totalorder %s90, %s104
      %p106 = scmp.eq.s32.totalorder %s26, 0
      %p107 = por %p105, %p106
      %s109 = sadd.s32 %s108, 1
      %p112 = scmp.eq.s32.totalorder %s20, 1
      %p113 = scmp.ne.s32.totalorder %s108, %s110
      %p114 = scmp.eq.s32.totalorder %s20, 0
      %p115 = por %p113, %p114
      %p116 = scmp.ne.s32.totalorder %s108, %s110
      %p117 = scmp.eq.s32.totalorder %s25, 1
      %p118 = por %p116, %p117
      %p119 = scmp.ne.s32.totalorder %s110, %s111
      %p120 = scmp.eq.s32.totalorder %s25, 0
      %p121 = por %p119, %p120
      %p122 = scmp.ne.s32.totalorder %s110, %s111
      %p123 = scmp.eq.s32.totalorder %s26, 1
      %p124 = por %p122, %p123
      %p126 = scmp.ne.s32.totalorder %s111, %s125
      %p127 = scmp.eq.s32.totalorder %s26, 0
      %p128 = por %p126, %p127
      %s130 = sadd.s32 %s129, 1
      %p133 = scmp.eq.s32.totalorder %s20, 1
      %p134 = scmp.ne.s32.totalorder %s129, %s131
      %p135 = scmp.eq.s32.totalorder %s20, 0
      %p136 = por %p134, %p135
      %p137 = scmp.ne.s32.totalorder %s129, %s131
      %p138 = scmp.eq.s32.totalorder %s25, 1
      %p139 = por %p137, %p138
      %p140 = scmp.ne.s32.totalorder %s131, %s132
      %p141 = scmp.eq.s32.totalorder %s25, 0
      %p142 = por %p140, %p141
      %p143 = scmp.ne.s32.totalorder %s131, %s132
      %p144 = scmp.eq.s32.totalorder %s26, 1
      %p145 = por %p143, %p144
      %p147 = scmp.ne.s32.totalorder %s132, %s146
      %p148 = scmp.eq.s32.totalorder %s26, 0
      %p149 = por %p147, %p148
      %s151 = sadd.s32 %s150, 1
      %p154 = scmp.eq.s32.totalorder %s20, 1
      %p155 = scmp.ne.s32.totalorder %s150, %s152
      %p156 = scmp.eq.s32.totalorder %s20, 0
      %p157 = por %p155, %p156
      %p158 = scmp.ne.s32.totalorder %s150, %s152
      %p159 = scmp.eq.s32.totalorder %s25, 1
      %p160 = por %p158, %p159
      %p161 = scmp.ne.s32.totalorder %s152, %s153
      %p162 = scmp.eq.s32.totalorder %s25, 0
      %p163 = por %p161, %p162
      %p164 = scmp.ne.s32.totalorder %s152, %s153
      %p165 = scmp.eq.s32.totalorder %s26, 1
      %p166 = por %p164, %p165
      %p168 = scmp.ne.s32.totalorder %s153, %s167
      %p169 = scmp.eq.s32.totalorder %s26, 0
      %p170 = por %p168, %p169
      %s172 = sadd.s32 %s171, 1
      %p175 = scmp.eq.s32.totalorder %s20, 1
      %p176 = scmp.ne.s32.totalorder %s171, %s173
      %p177 = scmp.eq.s32.totalorder %s20, 0
      %p178 = por %p176, %p177
      %p179 = scmp.ne.s32.totalorder %s171, %s173
      %p180 = scmp.eq.s32.totalorder %s25, 1
      %p181 = por %p179, %p180
      %p182 = scmp.ne.s32.totalorder %s173, %s174
      %p183 = scmp.eq.s32.totalorder %s25, 0
      %p184 = por %p182, %p183
      %p185 = scmp.ne.s32.totalorder %s173, %s174
      %p186 = scmp.eq.s32.totalorder %s26, 1
      %p187 = por %p185, %p186
      %p189 = scmp.ne.s32.totalorder %s174, %s188
      %p190 = scmp.eq.s32.totalorder %s26, 0
      %p191 = por %p189, %p190
      %s192 = ssub.s32 %s27, %s39
      %s193 = ssub.s32 %s28, %s35
      %s194 = sor.u32 %s192, %s193
      %p195 = scmp.eq.s32.totalorder %s194, 0
      %s197 = sadd.s32 %s196, 1
      %s198 = scalar_select %p195, %s196, %s197
      %p201 = pneg %p195
      %p202 = scmp.eq.s32.totalorder %s20, 1
      %p203 = por %p201, %p202
      %p204 = scmp.ne.s32.totalorder %s196, %s199
      %p205 = scmp.eq.s32.totalorder %s20, 0
      %p206 = por %p204, %p205
      %p207 = scmp.ne.s32.totalorder %s196, %s199
      %p208 = scmp.eq.s32.totalorder %s25, 1
      %p209 = por %p207, %p208
      %p210 = scmp.ne.s32.totalorder %s199, %s200
      %p211 = scmp.eq.s32.totalorder %s25, 0
      %p212 = por %p210, %p211
      %p213 = scmp.ne.s32.totalorder %s199, %s200
      %p214 = scmp.eq.s32.totalorder %s26, 1
      %p215 = por %p213, %p214
      %p217 = scmp.ne.s32.totalorder %s200, %s216
      %p218 = scmp.eq.s32.totalorder %s26, 0
      %p219 = por %p217, %p218
      %s220 = sadd.s32 %s28, 1
      %s221 = smul.u32 %s220, 2
      %s222 = sadd.s32 %s35, 1
      %s223 = smul.u32 %s222, 2
      %s224 = ssub.s32 %s27, %s39
      %s225 = ssub.s32 %s221, %s223
      %s226 = sor.u32 %s224, %s225
      %p227 = scmp.eq.s32.totalorder %s226, 0
      %s229 = sadd.s32 %s228, 1
      %s230 = scalar_select %p227, %s228, %s229
      %p233 = pneg %p227
      %p234 = scmp.eq.s32.totalorder %s20, 1
      %p235 = por %p233, %p234
      %p236 = scmp.ne.s32.totalorder %s228, %s231
      %p237 = scmp.eq.s32.totalorder %s20, 0
      %p238 = por %p236, %p237
      %p239 = scmp.ne.s32.totalorder %s228, %s231
      %p240 = scmp.eq.s32.totalorder %s25, 1
      %p241 = por %p239, %p240
      %p242 = scmp.ne.s32.totalorder %s231, %s232
      %p243 = scmp.eq.s32.totalorder %s25, 0
      %p244 = por %p242, %p243
      %p245 = scmp.ne.s32.totalorder %s231, %s232
      %p246 = scmp.eq.s32.totalorder %s26, 1
      %p247 = por %p245, %p246
      %p249 = scmp.ne.s32.totalorder %s232, %s248
      %p250 = scmp.eq.s32.totalorder %s26, 0
      %p251 = por %p249, %p250
      %s252 = ssub.s32 %s27, %s39
      %s253 = ssub.s32 %s28, %s35
      %s254 = sor.u32 %s252, %s253
      %p255 = scmp.eq.s32.totalorder %s254, 0
      %s257 = sadd.s32 %s256, 1
      %s258 = scalar_select %p255, %s256, %s257
      %p261 = pneg %p255
      %p262 = scmp.eq.s32.totalorder %s20, 1
      %p263 = por %p261, %p262
      %p264 = scmp.ne.s32.totalorder %s256, %s259
      %p265 = scmp.eq.s32.totalorder %s20, 0
      %p266 = por %p264, %p265
      %p267 = scmp.ne.s32.totalorder %s256, %s259
      %p268 = scmp.eq.s32.totalorder %s25, 1
      %p269 = por %p267, %p268
      %p270 = scmp.ne.s32.totalorder %s259, %s260
      %p271 = scmp.eq.s32.totalorder %s25, 0
      %p272 = por %p270, %p271
      %p273 = scmp.ne.s32.totalorder %s259, %s260
      %p274 = scmp.eq.s32.totalorder %s26, 1
      %p275 = por %p273, %p274
      %p277 = scmp.ne.s32.totalorder %s260, %s276
      %p278 = scmp.eq.s32.totalorder %s26, 0
      %p279 = por %p277, %p278
      %p280 = scmp.le.s32.totalorder 1, %s20
      %p281 = scmp.lt.s32.totalorder %s20, 3
      %p282 = pnand %p280, %p281
      %p283 = pneg %p282
      // Predicated region
      $region9: #{tpu_custom_call.1} parent=5 // pred_check
        _
      $region10: #{tpu_custom_call.1} parent=5 // pred_check_branch
        %285 = sbr.rel (%p282) target = $region12
      $region11: #{tpu_custom_call.1} parent=5 // pred_region
        %s286 = ssub.s32 %s20, 1
        // Predicated region
        $region13: #{tpu_custom_call.1} parent=11 // pred_check
          %p287 = pneg %p79
        $region14: #{tpu_custom_call.1} parent=11 // pred_check_branch
          %289 = sbr.rel (%p287) target = $region16
        $region15: #{tpu_custom_call.1} parent=11 // pred_region
          %291 = vsyncadd [#allocation6], 0
          %s293 = sshll.u32 %s1, 4
          %s294 = int_to_ptr.hbm [resolvable:$true] %s293
          %s295 = sshll.u32 [#allocation5], 4
          %s296 = int_to_ptr.vmem [resolvable:$true] %s295
          %298 = dma.hbm_to_vmem [thread:$0]  %s294, 256, %s296, [#allocation6]
        $region16: #{tpu_custom_call.1} parent=11 // pred_fallthru
          _
        // Predicated region
        $region17: #{tpu_custom_call.1} parent=11 // pred_check
          %p299 = pneg %p100
        $region18: #{tpu_custom_call.1} parent=11 // pred_check_branch
          %301 = sbr.rel (%p299) target = $region20
        $region19: #{tpu_custom_call.1} parent=11 // pred_region
          %303 = vsyncadd [#allocation6], 0
          %s305 = sshll.u32 %s2, 4
          %s306 = int_to_ptr.hbm [resolvable:$true] %s305
          %s307 = sshll.u32 [#allocation7], 4
          %s308 = int_to_ptr.vmem [resolvable:$true] %s307
          %310 = dma.hbm_to_vmem [thread:$0]  %s306, 32, %s308, [#allocation6]
        $region20: #{tpu_custom_call.1} parent=11 // pred_fallthru
          _
        // Predicated region
        $region21: #{tpu_custom_call.1} parent=11 // pred_check
          %p311 = pneg %p121
        $region22: #{tpu_custom_call.1} parent=11 // pred_check_branch
          %313 = sbr.rel (%p311) target = $region24
        $region23: #{tpu_custom_call.1} parent=11 // pred_region
          %315 = vsyncadd [#allocation9], 0
          %s316 = sshll.u32 %s3, 4
          %s317 = int_to_ptr.hbm [resolvable:$true] %s316
          %s318 = sshll.u32 [#allocation8], 4
          %s319 = int_to_ptr.vmem [resolvable:$true] %s318
          %324 = dma.hbm_to_vmem [thread:$0]  %s317, 4096, %s319, [#allocation9], 128, 128, 8
        $region24: #{tpu_custom_call.1} parent=11 // pred_fallthru
          _
        // Predicated region
        $region25: #{tpu_custom_call.1} parent=11 // pred_check
          %p325 = pneg %p142
        $region26: #{tpu_custom_call.1} parent=11 // pred_check_branch
          %327 = sbr.rel (%p325) target = $region28
        $region27: #{tpu_custom_call.1} parent=11 // pred_region
          _
        $region28: #{tpu_custom_call.1} parent=11 // pred_fallthru
          _
        // Predicated region
        $region29: #{tpu_custom_call.1} parent=11 // pred_check
          %p328 = pneg %p163
        $region30: #{tpu_custom_call.1} parent=11 // pred_check_branch
          %330 = sbr.rel (%p328) target = $region32
        $region31: #{tpu_custom_call.1} parent=11 // pred_region
          _
        $region32: #{tpu_custom_call.1} parent=11 // pred_fallthru
          _
        // Predicated region
        $region33: #{tpu_custom_call.1} parent=11 // pred_check
          %p331 = pneg %p184
        $region34: #{tpu_custom_call.1} parent=11 // pred_check_branch
          %333 = sbr.rel (%p331) target = $region36
        $region35: #{tpu_custom_call.1} parent=11 // pred_region
          _
        $region36: #{tpu_custom_call.1} parent=11 // pred_fallthru
          _
      $region12: #{tpu_custom_call.1} parent=5 // pred_fallthru
        _
      %p334 = scmp.lt.s32.totalorder %s20, 2
      // Predicated region
      $region37: #{tpu_custom_call.1} parent=5 // pred_check
        %p335 = pneg %p334
      $region38: #{tpu_custom_call.1} parent=5 // pred_check_branch
        %337 = sbr.rel (%p335) target = $region40
      $region39: #{tpu_custom_call.1} parent=5 // pred_region
        // Predicated region
        $region41: #{tpu_custom_call.1} parent=39 // pred_check
          %p338 = pneg %p52
        $region42: #{tpu_custom_call.1} parent=39 // pred_check_branch
          %340 = sbr.rel (%p338) target = $region44
        $region43: #{tpu_custom_call.1} parent=39 // pred_region
          %s341 = sand.u32 %s20, 1
          %s342 = scalar_lea.sflag [#allocation4], %s341
          %s343 = sand.u32 %s42, 1
          %s344 = scalar_lea.vmem [#allocation3], %s343
          %346 = vsyncadd %s342, 0
          %s347 = scalar_lea.hbm %s0, %s27
          %s349 = sshll.u32 %s347, 4
          %s350 = int_to_ptr.hbm [resolvable:$true] %s349
          %s351 = sshll.u32 %s344, 4
          %s352 = int_to_ptr.vmem [resolvable:$true] %s351
          %354 = dma.hbm_to_vmem [thread:$0]  %s350, 16, %s352, %s342
        $region44: #{tpu_custom_call.1} parent=39 // pred_fallthru
          _
        // Predicated region
        $region45: #{tpu_custom_call.1} parent=39 // pred_check
          %p355 = pneg %p206
        $region46: #{tpu_custom_call.1} parent=39 // pred_check_branch
          %357 = sbr.rel (%p355) target = $region48
        $region47: #{tpu_custom_call.1} parent=39 // pred_region
          %s358 = sand.u32 %s20, 1
          %s359 = scalar_lea.sflag [#allocation4], %s358
          %s360 = sand.u32 %s196, 1
          %s361 = smul.addr %s360, 8
          %s362 = scalar_lea.vmem [#allocation10], %s361
          %s363 = smul.u32 2, %s28
          %365 = vsyncadd %s359, 0
          %s366 = smul.addr %s27, 4
          %s367 = sadd.s32 %s363, %s366
          %s368 = smul.addr %s367, 4
          %s369 = scalar_lea.hbm %s7, %s368
          %s371 = sshll.u32 %s369, 4
          %s372 = int_to_ptr.hbm [resolvable:$true] %s371
          %s373 = sshll.u32 %s362, 4
          %s374 = int_to_ptr.vmem [resolvable:$true] %s373
          %376 = dma.hbm_to_vmem [thread:$0]  %s372, 128, %s374, %s359
        $region48: #{tpu_custom_call.1} parent=39 // pred_fallthru
          _
        // Predicated region
        $region49: #{tpu_custom_call.1} parent=39 // pred_check
          %p377 = pneg %p238
        $region50: #{tpu_custom_call.1} parent=39 // pred_check_branch
          %379 = sbr.rel (%p377) target = $region52
        $region51: #{tpu_custom_call.1} parent=39 // pred_region
          %s380 = sand.u32 %s20, 1
          %s381 = scalar_lea.sflag [#allocation4], %s380
          %s382 = sand.u32 %s228, 1
          %s383 = smul.addr %s382, 4
          %s384 = scalar_lea.vmem [#allocation11], %s383
          %s385 = sadd.s32 %s28, 1
          %s386 = smul.u32 %s385, 2
          %388 = vsyncadd %s381, 0
          %s389 = smul.addr %s27, 4
          %s390 = sadd.s32 %s386, %s389
          %s391 = smul.addr %s390, 4
          %s392 = scalar_lea.hbm %s8, %s391
          %s394 = sshll.u32 %s392, 4
          %s395 = int_to_ptr.hbm [resolvable:$true] %s394
          %s396 = sshll.u32 %s384, 4
          %s397 = int_to_ptr.vmem [resolvable:$true] %s396
          %399 = dma.hbm_to_vmem [thread:$0]  %s395, 64, %s397, %s381
        $region52: #{tpu_custom_call.1} parent=39 // pred_fallthru
          _
      $region40: #{tpu_custom_call.1} parent=5 // pred_fallthru
        _
      %p400 = scmp.le.s32.totalorder 1, %s20
      %p401 = scmp.lt.s32.totalorder %s20, 3
      %p402 = pnand %p400, %p401
      %p403 = pneg %p402
      // Predicated region
      $region53: #{tpu_custom_call.1} parent=5 // pred_check
        _
      $region54: #{tpu_custom_call.1} parent=5 // pred_check_branch
        %405 = sbr.rel (%p402) target = $region56
      $region55: #{tpu_custom_call.1} parent=5 // pred_region
        %s406 = ssub.s32 %s20, 1
        %s407 = sand.u32 %s25, 1
        %s408 = scalar_lea.sflag [#allocation4], %s407
        %s409 = sand.u32 %s45, 1
        %s410 = scalar_lea.vmem [#allocation3], %s409
        // Predicated region
        $region57: #{tpu_custom_call.1} parent=55 // pred_check
          %p411 = pneg %p58
        $region58: #{tpu_custom_call.1} parent=55 // pred_check_branch
          %413 = sbr.rel (%p411) target = $region60
        $region59: #{tpu_custom_call.1} parent=55 // pred_region
          %415 = dma.done %s408, 16
        $region60: #{tpu_custom_call.1} parent=55 // pred_fallthru
          _
        // Predicated region
        $region61: #{tpu_custom_call.1} parent=55 // pred_check
          %p416 = pneg %p79
        $region62: #{tpu_custom_call.1} parent=55 // pred_check_branch
          %418 = sbr.rel (%p416) target = $region64
        $region63: #{tpu_custom_call.1} parent=55 // pred_region
          %420 = dma.done [#allocation6], 256
        $region64: #{tpu_custom_call.1} parent=55 // pred_fallthru
          _
        // Predicated region
        $region65: #{tpu_custom_call.1} parent=55 // pred_check
          %p421 = pneg %p100
        $region66: #{tpu_custom_call.1} parent=55 // pred_check_branch
          %423 = sbr.rel (%p421) target = $region68
        $region67: #{tpu_custom_call.1} parent=55 // pred_region
          %425 = dma.done [#allocation6], 32
        $region68: #{tpu_custom_call.1} parent=55 // pred_fallthru
          _
        // Predicated region
        $region69: #{tpu_custom_call.1} parent=55 // pred_check
          %p426 = pneg %p121
        $region70: #{tpu_custom_call.1} parent=55 // pred_check_branch
          %428 = sbr.rel (%p426) target = $region72
        $region71: #{tpu_custom_call.1} parent=55 // pred_region
          %430 = dma.done [#allocation9], 4096
        $region72: #{tpu_custom_call.1} parent=55 // pred_fallthru
          _
        %s431 = sand.u32 %s25, 1
        %s432 = scalar_lea.sflag [#allocation4], %s431
        %s433 = sand.u32 %s199, 1
        %s434 = smul.addr %s433, 8
        %s435 = scalar_lea.vmem [#allocation10], %s434
        // Predicated region
        $region73: #{tpu_custom_call.1} parent=55 // pred_check
          %p436 = pneg %p212
        $region74: #{tpu_custom_call.1} parent=55 // pred_check_branch
          %438 = sbr.rel (%p436) target = $region76
        $region75: #{tpu_custom_call.1} parent=55 // pred_region
          %440 = dma.done %s432, 128
        $region76: #{tpu_custom_call.1} parent=55 // pred_fallthru
          _
        %s441 = sand.u32 %s25, 1
        %s442 = scalar_lea.sflag [#allocation4], %s441
        %s443 = sand.u32 %s231, 1
        %s444 = smul.addr %s443, 4
        %s445 = scalar_lea.vmem [#allocation11], %s444
        // Predicated region
        $region77: #{tpu_custom_call.1} parent=55 // pred_check
          %p446 = pneg %p244
        $region78: #{tpu_custom_call.1} parent=55 // pred_check_branch
          %448 = sbr.rel (%p446) target = $region80
        $region79: #{tpu_custom_call.1} parent=55 // pred_region
          %450 = dma.done %s442, 64
        $region80: #{tpu_custom_call.1} parent=55 // pred_fallthru
          _
        %s451 = sand.u32 %s25, 1
        %s452 = scalar_lea.sflag [#allocation4], %s451
        %s453 = sand.u32 %s45, 1
        %s454 = scalar_lea.vmem [#allocation3], %s453
        %p455 = pneg %p58
        %p456 = pneg %p55
        %p457 = pneg %p79
        %p458 = pneg %p76
        %p459 = pneg %p100
        %p460 = pneg %p97
        %p461 = pneg %p121
        %p462 = pneg %p118
        %p463 = pneg %p142
        %p464 = pneg %p139
        %p465 = pneg %p163
        %p466 = pneg %p160
        %p467 = pneg %p184
        %p468 = pneg %p181
        %s469 = sand.u32 %s25, 1
        %s470 = scalar_lea.sflag [#allocation4], %s469
        %s471 = sand.u32 %s199, 1
        %s472 = smul.addr %s471, 8
        %s473 = scalar_lea.vmem [#allocation10], %s472
        %p474 = pneg %p212
        %p475 = pneg %p209
        %s476 = sand.u32 %s25, 1
        %s477 = scalar_lea.sflag [#allocation4], %s476
        %s478 = sand.u32 %s231, 1
        %s479 = smul.addr %s478, 4
        %s480 = scalar_lea.vmem [#allocation11], %s479
        %p481 = pneg %p244
        %p482 = pneg %p241
        %p483 = pneg %p272
        %p484 = pneg %p269
        %s485 = smul.u32 2, %s30
        %p486 = scmp.lt.s32.totalorder %s29, 1
        %s487 = scalar_select %p486, %s29, 1
        %p488 = scmp.lt.s32.totalorder %s485, 1
        %s489 = scalar_select %p488, %s485, 1
        %s490 = smul.addr %s487, 2
        %s491 = sadd.s32 %s489, %s490
        %s492 = smul.addr %s491, 4
        %s493 = scalar_lea.vmem %s9, %s492
        %s494 = smul.u32 2, %s30
        %s495 = sadd.s32 %s30, 1
        %s496 = smul.u32 %s495, 2
        %s497 = smul.u32 2, %s30
        %p498 = scmp.lt.s32.totalorder %s29, 1
        %s499 = scalar_select %p498, %s29, 1
        %p500 = scmp.lt.s32.totalorder %s497, 1
        %s501 = scalar_select %p500, %s497, 1
        %s502 = smul.addr %s499, 2
        %s503 = sadd.s32 %s501, %s502
        %s504 = smul.addr %s503, 4
        %s505 = scalar_lea.vmem %s9, %s504
        %s506 = smul.u32 2, %s30
        %p507 = scmp.eq.s32.totalorder %s30, 0
        // Predicated region
        $region81: #{tpu_custom_call.1} parent=55 // pred_check
          %p508 = pneg %p507
        $region82: #{tpu_custom_call.1} parent=55 // pred_check_branch
          %510 = sbr.rel (%p508) target = $region84
        $region83: #{tpu_custom_call.1} parent=55 // pred_region
          %v511 = vld [vmem:[%s410] sm:$0x1]
          %v512 = vld [vmem:[#allocation5] sm:$0xff]
          %v513 = vld [vmem:[#allocation5 + $0x8] sm:$0xff]
          %v514 = vld [vmem:[#allocation7] sm:$0x3]
          %v516 = vperm.slane %v514, 0
          %v517 = vperm.slane %v514, 1
          %vm520 = vcmask 64512
          %v522 = vsel %vm520, %v511, 0
          %524 = vmatpush.msra.mxu0 0.0
          %525 = vmatpush.msra.mxu0 0.0
          %526 = vmatpush.msra.mxu0 0.0
          %527 = vmatpush.msra.mxu0 0.0
          %528 = vmatpush.msra.mxu0 0.0
          %529 = vmatpush.msra.mxu0 0.0
          %530 = vmatpush.msra.mxu0 0.0
          %531 = vmatpush.msra.mxu0 0.0
          %532 = vmatpush.msra.mxu0 0.0
          %533 = vmatpush.msra.mxu0 0.0
          %534 = vmatpush.msra.mxu0 0.0
          %535 = vmatpush.msra.mxu0 0.0
          %536 = vmatpush.msra.mxu0 0.0
          %537 = vmatpush.msra.mxu0 0.0
          %538 = vmatpush.msra.mxu0 0.0
          %539 = vmatpush.msra.mxu0 %v512
          %540 = vmatmul.f32.gmra.mxu0 %v522
          %v541 = vpop.f32.mrf.mxu0
          %v542 = vadd.f32 %v516, %v541
          %543 = vdwg.mxu0
          %544 = vmatpush.msra.mxu0 0.0
          %545 = vmatpush.msra.mxu0 0.0
          %546 = vmatpush.msra.mxu0 0.0
          %547 = vmatpush.msra.mxu0 0.0
          %548 = vmatpush.msra.mxu0 0.0
          %549 = vmatpush.msra.mxu0 0.0
          %550 = vmatpush.msra.mxu0 0.0
          %551 = vmatpush.msra.mxu0 0.0
          %552 = vmatpush.msra.mxu0 0.0
          %553 = vmatpush.msra.mxu0 0.0
          %554 = vmatpush.msra.mxu0 0.0
          %555 = vmatpush.msra.mxu0 0.0
          %556 = vmatpush.msra.mxu0 0.0
          %557 = vmatpush.msra.mxu0 0.0
          %558 = vmatpush.msra.mxu0 0.0
          %559 = vmatpush.msra.mxu0 %v513
          %560 = vmatmul.f32.gmra.mxu0 %v522
          %v561 = vpop.f32.mrf.mxu0
          %v562 = vadd.f32 %v517, %v561
          %563 = vdwg.mxu0
          %v564 = vmax.f32 %v542, 0.0
          %v565 = vmax.f32 %v562, 0.0
          %v566 = vld [vmem:[#allocation8] sm:$0xff]
          %v567 = vld [vmem:[#allocation8 + $0x8] sm:$0xff]
          %v568 = vld [vmem:[#allocation8 + $0x10] sm:$0xff]
          %v569 = vld [vmem:[#allocation8 + $0x18] sm:$0xff]
          %v570 = vld [vmem:[#allocation8 + $0x20] sm:$0xff]
          %v571 = vld [vmem:[#allocation8 + $0x28] sm:$0xff]
          %v572 = vld [vmem:[#allocation8 + $0x30] sm:$0xff]
          %v573 = vld [vmem:[#allocation8 + $0x38] sm:$0xff]
          %v574 = vld [vmem:[#allocation8 + $0x40] sm:$0xff]
          %v575 = vld [vmem:[#allocation8 + $0x48] sm:$0xff]
          %v576 = vld [vmem:[#allocation8 + $0x50] sm:$0xff]
          %v577 = vld [vmem:[#allocation8 + $0x58] sm:$0xff]
          %v578 = vld [vmem:[#allocation8 + $0x60] sm:$0xff]
          %v579 = vld [vmem:[#allocation8 + $0x68] sm:$0xff]
          %v580 = vld [vmem:[#allocation8 + $0x70] sm:$0xff]
          %v581 = vld [vmem:[#allocation8 + $0x78] sm:$0xff]
          %v582 = vld [vmem:[#allocation8 + $0x80] sm:$0xff]
          %v583 = vld [vmem:[#allocation8 + $0x88] sm:$0xff]
          %v584 = vld [vmem:[#allocation8 + $0x90] sm:$0xff]
          %v585 = vld [vmem:[#allocation8 + $0x98] sm:$0xff]
          %v586 = vld [vmem:[#allocation8 + $0xa0] sm:$0xff]
          %v587 = vld [vmem:[#allocation8 + $0xa8] sm:$0xff]
          %v588 = vld [vmem:[#allocation8 + $0xb0] sm:$0xff]
          %v589 = vld [vmem:[#allocation8 + $0xb8] sm:$0xff]
          %v590 = vld [vmem:[#allocation8 + $0xc0] sm:$0xff]
          %v591 = vld [vmem:[#allocation8 + $0xc8] sm:$0xff]
          %v592 = vld [vmem:[#allocation8 + $0xd0] sm:$0xff]
          %v593 = vld [vmem:[#allocation8 + $0xd8] sm:$0xff]
          %v594 = vld [vmem:[#allocation8 + $0xe0] sm:$0xff]
          %v595 = vld [vmem:[#allocation8 + $0xe8] sm:$0xff]
          %v596 = vld [vmem:[#allocation8 + $0xf0] sm:$0xff]
          %v597 = vld [vmem:[#allocation8 + $0xf8] sm:$0xff]
          %v598 = vld [vmem:[%s4] sm:$0x1]
          %599 = vmatpush.msra.mxu0 %v581
          %600 = vmatpush.msra.mxu0 %v580
          %601 = vmatpush.msra.mxu0 %v579
          %602 = vmatpush.msra.mxu0 %v578
          %603 = vmatpush.msra.mxu0 %v577
          %604 = vmatpush.msra.mxu0 %v576
          %605 = vmatpush.msra.mxu0 %v575
          %606 = vmatpush.msra.mxu0 %v574
          %607 = vmatpush.msra.mxu0 %v573
          %608 = vmatpush.msra.mxu0 %v572
          %609 = vmatpush.msra.mxu0 %v571
          %610 = vmatpush.msra.mxu0 %v570
          %611 = vmatpush.msra.mxu0 %v569
          %612 = vmatpush.msra.mxu0 %v568
          %613 = vmatpush.msra.mxu0 %v567
          %614 = vmatpush.msra.mxu0 %v566
          %615 = vmatmul.f32.gmra.mxu0 %v564
          %v616 = vpop.f32.mrf.mxu0
          %v617 = vadd.f32 %v598, %v616
          %618 = vdwg.mxu0
          %619 = vmatpush.msra.mxu0 %v597
          %620 = vmatpush.msra.mxu0 %v596
          %621 = vmatpush.msra.mxu0 %v595
          %622 = vmatpush.msra.mxu0 %v594
          %623 = vmatpush.msra.mxu0 %v593
          %624 = vmatpush.msra.mxu0 %v592
          %625 = vmatpush.msra.mxu0 %v591
          %626 = vmatpush.msra.mxu0 %v590
          %627 = vmatpush.msra.mxu0 %v589
          %628 = vmatpush.msra.mxu0 %v588
          %629 = vmatpush.msra.mxu0 %v587
          %630 = vmatpush.msra.mxu0 %v586
          %631 = vmatpush.msra.mxu0 %v585
          %632 = vmatpush.msra.mxu0 %v584
          %633 = vmatpush.msra.mxu0 %v583
          %634 = vmatpush.msra.mxu0 %v582
          %635 = vmatmul.f32.gmra.mxu0 %v565
          %v636 = vpop.f32.mrf.mxu0
          %v637 = vadd.f32 %v617, %v636
          %638 = vdwg.mxu0
          %v640 = vrot.slane %v637, 7
          %641 = vrot.lane.b32.xlu0 %v640, 92
          %v642 = vpop.permute.xlu0 %641
          %v644 = vrot.slane %v637, 6
          %645 = vrot.lane.b32.xlu0 %v644, 56
          %v646 = vpop.permute.xlu0 %645
          %vm648 = vcmask 1040384
          %v649 = vsel %vm648, %v637, %v642
          %vm650 = vcmask 1041408
          %v651 = vsel %vm650, %v649, %v646
          %vm652 = vcmask 288768
          %v653 = vsel %vm652, %v651, 0.0
          %654 = vadd.xlane.f32.xlu0 %v653
          %v655 = vpop.xlane.xlu0 %654
          %v656 = vrcp.pop 36.0
          %v657 = vmul.f32 36.0, %v656
          %v658 = vsub.f32 1.0, %v657
          %v659 = vmul.f32 %v656, %v658
          %v660 = vadd.f32 %v656, %v659
          %vm661 = vweird.f32 %v656
          %v662 = vsel %vm661, %v656, %v660
          %v663 = vmul.f32 %v655, %v662
          %v664 = vsub.f32 %v651, %v663
          %v665 = vmul.f32 %v664, %v664
          %v666 = vsel %vm652, %v665, 0.0
          %667 = vadd.xlane.f32.xlu0 %v666
          %v668 = vpop.xlane.xlu0 %667
          %v669 = vmul.f32 %v668, %v662
          %v670 = vadd.f32 %v669, 1e-05
          %v671 = vrsqrt.pop %v670
          %v672 = vmul.f32 %v671, %v670
          %v673 = vmul.f32 %v672, %v671
          %v674 = vmul.f32 0.5, %v673
          %v675 = vsub.f32 1.5, %v674
          %v676 = vmul.f32 %v671, %v675
          %vm677 = vweird.f32 %v670
          %vm678 = vweird.f32 %v671
          %vm679 = vmor %vm677, %vm678
          %v680 = vsel %vm679, %v671, %v676
          %v681 = vmul.f32 %v664, %v680
          %v682 = vld [vmem:[%s5] sm:$0x1]
          %v684 = vperm.slane %v682, 0
          %v686 = vmul.f32 %v681, %v684
          %v687 = vld [vmem:[%s6] sm:$0x1]
          %v689 = vperm.slane %v687, 0
          %v691 = vadd.f32 %v686, %v689
          %v692 = vmul.f32 %v691, 0.25
          %693 = vst.msk [vmem:[#allocation2] sm:$0x7] %vm652, %v692
        $region84: #{tpu_custom_call.1} parent=55 // pred_fallthru
          _
        %v694 = vld [vmem:[#allocation2] sm:$0x7]
        %v695 = vld [vmem:[%s435] sm:$0xff]
        %v696 = vld [vmem:[%s445] sm:$0xf]
        %698 = vst [vmem:[#allocation1] ss:$2 sm:$0xff] %v695
        %v699 = vld.sshfl [vmem:[#allocation1] sm:$0xff pattern:$0x75316420]
        %v700 = vld.sshfl [vmem:[#allocation1 + $0x8] sm:$0xff pattern:$0x75316420]
        %702 = vrot.lane.b32.xlu0 %v694, 124
        %v703 = vpop.permute.xlu0 %702
        %705 = vrot.lane.b32.xlu0 %v699, 127
        %v706 = vpop.permute.xlu0 %705
        %707 = vrot.lane.b32.xlu0 %v700, 127
        %v708 = vpop.permute.xlu0 %707
        %709 = vrot.lane.b32.xlu0 %v696, 127
        %v710 = vpop.permute.xlu0 %709
        %vm711 = vcmask 1039360
        %v712 = vsel %vm711, %v706, %v708
        %v713 = vsel %vm711, %v708, %v710
        %vm714 = vcmask 31744
        %v715 = vsel %vm714, %v703, 0
        %vm717 = vcmask 1043456
        %v718 = vsel %vm717, %v712, 0
        %v720 = vsel %vm717, %v713, 0
        %722 = vmatpush.msra.mxu0 0.0
        %723 = vmatpush.msra.mxu0 0.0
        %724 = vmatpush.msra.mxu0 0.0
        %725 = vmatpush.msra.mxu0 0.0
        %726 = vmatpush.msra.mxu0 0.0
        %727 = vmatpush.msra.mxu0 0.0
        %728 = vmatpush.msra.mxu0 0.0
        %729 = vmatpush.msra.mxu0 0.0
        %730 = vmatpush.msra.mxu0 0.0
        %731 = vmatpush.msra.mxu0 0.0
        %732 = vmatpush.msra.mxu0 0.0
        %733 = vmatpush.msra.mxu0 0.0
        %734 = vmatpush.msra.mxu0 0.0
        %735 = vmatpush.msra.mxu0 0.0
        %736 = vmatpush.msra.mxu0 0.0
        %737 = vmatpush.msra.mxu0 %v718
        %738 = vmatmul.f32.gmra.mxu0 %v715
        %v739 = vpop.f32.mrf.mxu0
        %v740 = vadd.f32 0.0, %v739
        %741 = vdwg.mxu0
        %742 = vmatpush.msra.mxu0 0.0
        %743 = vmatpush.msra.mxu0 0.0
        %744 = vmatpush.msra.mxu0 0.0
        %745 = vmatpush.msra.mxu0 0.0
        %746 = vmatpush.msra.mxu0 0.0
        %747 = vmatpush.msra.mxu0 0.0
        %748 = vmatpush.msra.mxu0 0.0
        %749 = vmatpush.msra.mxu0 0.0
        %750 = vmatpush.msra.mxu0 0.0
        %751 = vmatpush.msra.mxu0 0.0
        %752 = vmatpush.msra.mxu0 0.0
        %753 = vmatpush.msra.mxu0 0.0
        %754 = vmatpush.msra.mxu0 0.0
        %755 = vmatpush.msra.mxu0 0.0
        %756 = vmatpush.msra.mxu0 0.0
        %757 = vmatpush.msra.mxu0 %v720
        %758 = vmatmul.f32.gmra.mxu0 %v715
        %v759 = vpop.f32.mrf.mxu0
        %v760 = vadd.f32 0.0, %v759
        %761 = vdwg.mxu0
        %v762 = vsel %vm714, %v694, 0
        %v764 = vsel %vm717, %v699, 0
        %v766 = vsel %vm717, %v700, 0
        %768 = vmatpush.msra.mxu0 0.0
        %769 = vmatpush.msra.mxu0 0.0
        %770 = vmatpush.msra.mxu0 0.0
        %771 = vmatpush.msra.mxu0 0.0
        %772 = vmatpush.msra.mxu0 0.0
        %773 = vmatpush.msra.mxu0 0.0
        %774 = vmatpush.msra.mxu0 0.0
        %775 = vmatpush.msra.mxu0 0.0
        %776 = vmatpush.msra.mxu0 0.0
        %777 = vmatpush.msra.mxu0 0.0
        %778 = vmatpush.msra.mxu0 0.0
        %779 = vmatpush.msra.mxu0 0.0
        %780 = vmatpush.msra.mxu0 0.0
        %781 = vmatpush.msra.mxu0 0.0
        %782 = vmatpush.msra.mxu0 0.0
        %783 = vmatpush.msra.mxu0 %v764
        %784 = vmatmul.f32.gmra.mxu0 %v762
        %v785 = vpop.f32.mrf.mxu0
        %v786 = vadd.f32 %v740, %v785
        %787 = vdwg.mxu0
        %788 = vmatpush.msra.mxu0 0.0
        %789 = vmatpush.msra.mxu0 0.0
        %790 = vmatpush.msra.mxu0 0.0
        %791 = vmatpush.msra.mxu0 0.0
        %792 = vmatpush.msra.mxu0 0.0
        %793 = vmatpush.msra.mxu0 0.0
        %794 = vmatpush.msra.mxu0 0.0
        %795 = vmatpush.msra.mxu0 0.0
        %796 = vmatpush.msra.mxu0 0.0
        %797 = vmatpush.msra.mxu0 0.0
        %798 = vmatpush.msra.mxu0 0.0
        %799 = vmatpush.msra.mxu0 0.0
        %800 = vmatpush.msra.mxu0 0.0
        %801 = vmatpush.msra.mxu0 0.0
        %802 = vmatpush.msra.mxu0 0.0
        %803 = vmatpush.msra.mxu0 %v766
        %804 = vmatmul.f32.gmra.mxu0 %v762
        %v805 = vpop.f32.mrf.mxu0
        %v806 = vadd.f32 %v760, %v805
        %807 = vdwg.mxu0
        %808 = vrot.lane.b32.xlu0 %v694, 120
        %v809 = vpop.permute.xlu0 %808
        %810 = vrot.lane.b32.xlu0 %v699, 126
        %v811 = vpop.permute.xlu0 %810
        %812 = vrot.lane.b32.xlu0 %v700, 126
        %v813 = vpop.permute.xlu0 %812
        %814 = vrot.lane.b32.xlu0 %v696, 126
        %v815 = vpop.permute.xlu0 %814
        %vm816 = vcmask 1031168
        %v817 = vsel %vm816, %v811, %v813
        %v818 = vsel %vm816, %v813, %v815
        %v819 = vsel %vm714, %v809, 0
        %v821 = vsel %vm717, %v817, 0
        %v823 = vsel %vm717, %v818, 0
        %825 = vmatpush.msra.mxu0 0.0
        %826 = vmatpush.msra.mxu0 0.0
        %827 = vmatpush.msra.mxu0 0.0
        %828 = vmatpush.msra.mxu0 0.0
        %829 = vmatpush.msra.mxu0 0.0
        %830 = vmatpush.msra.mxu0 0.0
        %831 = vmatpush.msra.mxu0 0.0
        %832 = vmatpush.msra.mxu0 0.0
        %833 = vmatpush.msra.mxu0 0.0
        %834 = vmatpush.msra.mxu0 0.0
        %835 = vmatpush.msra.mxu0 0.0
        %836 = vmatpush.msra.mxu0 0.0
        %837 = vmatpush.msra.mxu0 0.0
        %838 = vmatpush.msra.mxu0 0.0
        %839 = vmatpush.msra.mxu0 0.0
        %840 = vmatpush.msra.mxu0 %v821
        %841 = vmatmul.f32.gmra.mxu0 %v819
        %v842 = vpop.f32.mrf.mxu0
        %v843 = vadd.f32 0.0, %v842
        %844 = vdwg.mxu0
        %845 = vmatpush.msra.mxu0 0.0
        %846 = vmatpush.msra.mxu0 0.0
        %847 = vmatpush.msra.mxu0 0.0
        %848 = vmatpush.msra.mxu0 0.0
        %849 = vmatpush.msra.mxu0 0.0
        %850 = vmatpush.msra.mxu0 0.0
        %851 = vmatpush.msra.mxu0 0.0
        %852 = vmatpush.msra.mxu0 0.0
        %853 = vmatpush.msra.mxu0 0.0
        %854 = vmatpush.msra.mxu0 0.0
        %855 = vmatpush.msra.mxu0 0.0
        %856 = vmatpush.msra.mxu0 0.0
        %857 = vmatpush.msra.mxu0 0.0
        %858 = vmatpush.msra.mxu0 0.0
        %859 = vmatpush.msra.mxu0 0.0
        %860 = vmatpush.msra.mxu0 %v823
        %861 = vmatmul.f32.gmra.mxu0 %v819
        %v862 = vpop.f32.mrf.mxu0
        %v863 = vadd.f32 0.0, %v862
        %864 = vdwg.mxu0
        %v865 = vadd.f32 %v786, %v843
        %v866 = vadd.f32 %v806, %v863
        %867 = vrot.lane.b32.xlu0 %v694, 116
        %v868 = vpop.permute.xlu0 %867
        %869 = vrot.lane.b32.xlu0 %v699, 112
        %v870 = vpop.permute.xlu0 %869
        %871 = vrot.lane.b32.xlu0 %v700, 112
        %v872 = vpop.permute.xlu0 %871
        %873 = vrot.lane.b32.xlu0 %v696, 112
        %v874 = vpop.permute.xlu0 %873
        %vm875 = vcmask 916480
        %v876 = vsel %vm875, %v870, %v872
        %v877 = vsel %vm875, %v872, %v874
        %v878 = vsel %vm714, %v868, 0
        %v880 = vsel %vm717, %v876, 0
        %v882 = vsel %vm717, %v877, 0
        %884 = vmatpush.msra.mxu0 0.0
        %885 = vmatpush.msra.mxu0 0.0
        %886 = vmatpush.msra.mxu0 0.0
        %887 = vmatpush.msra.mxu0 0.0
        %888 = vmatpush.msra.mxu0 0.0
        %889 = vmatpush.msra.mxu0 0.0
        %890 = vmatpush.msra.mxu0 0.0
        %891 = vmatpush.msra.mxu0 0.0
        %892 = vmatpush.msra.mxu0 0.0
        %893 = vmatpush.msra.mxu0 0.0
        %894 = vmatpush.msra.mxu0 0.0
        %895 = vmatpush.msra.mxu0 0.0
        %896 = vmatpush.msra.mxu0 0.0
        %897 = vmatpush.msra.mxu0 0.0
        %898 = vmatpush.msra.mxu0 0.0
        %899 = vmatpush.msra.mxu0 %v880
        %900 = vmatmul.f32.gmra.mxu0 %v878
        %v901 = vpop.f32.mrf.mxu0
        %v902 = vadd.f32 0.0, %v901
        %903 = vdwg.mxu0
        %904 = vmatpush.msra.mxu0 0.0
        %905 = vmatpush.msra.mxu0 0.0
        %906 = vmatpush.msra.mxu0 0.0
        %907 = vmatpush.msra.mxu0 0.0
        %908 = vmatpush.msra.mxu0 0.0
        %909 = vmatpush.msra.mxu0 0.0
        %910 = vmatpush.msra.mxu0 0.0
        %911 = vmatpush.msra.mxu0 0.0
        %912 = vmatpush.msra.mxu0 0.0
        %913 = vmatpush.msra.mxu0 0.0
        %914 = vmatpush.msra.mxu0 0.0
        %915 = vmatpush.msra.mxu0 0.0
        %916 = vmatpush.msra.mxu0 0.0
        %917 = vmatpush.msra.mxu0 0.0
        %918 = vmatpush.msra.mxu0 0.0
        %919 = vmatpush.msra.mxu0 %v882
        %920 = vmatmul.f32.gmra.mxu0 %v878
        %v921 = vpop.f32.mrf.mxu0
        %v922 = vadd.f32 0.0, %v921
        %923 = vdwg.mxu0
        %v924 = vadd.f32 %v865, %v902
        %v925 = vadd.f32 %v866, %v922
        %926 = vrot.lane.b32.xlu0 %v694, 112
        %v927 = vpop.permute.xlu0 %926
        %928 = vrot.lane.b32.xlu0 %v699, 111
        %v929 = vpop.permute.xlu0 %928
        %930 = vrot.lane.b32.xlu0 %v700, 111
        %v931 = vpop.permute.xlu0 %930
        %932 = vrot.lane.b32.xlu0 %v696, 111
        %v933 = vpop.permute.xlu0 %932
        %vm934 = vcmask 908288
        %v935 = vsel %vm934, %v929, %v931
        %v936 = vsel %vm934, %v931, %v933
        %v937 = vsel %vm714, %v927, 0
        %v939 = vsel %vm717, %v935, 0
        %v941 = vsel %vm717, %v936, 0
        %943 = vmatpush.msra.mxu0 0.0
        %944 = vmatpush.msra.mxu0 0.0
        %945 = vmatpush.msra.mxu0 0.0
        %946 = vmatpush.msra.mxu0 0.0
        %947 = vmatpush.msra.mxu0 0.0
        %948 = vmatpush.msra.mxu0 0.0
        %949 = vmatpush.msra.mxu0 0.0
        %950 = vmatpush.msra.mxu0 0.0
        %951 = vmatpush.msra.mxu0 0.0
        %952 = vmatpush.msra.mxu0 0.0
        %953 = vmatpush.msra.mxu0 0.0
        %954 = vmatpush.msra.mxu0 0.0
        %955 = vmatpush.msra.mxu0 0.0
        %956 = vmatpush.msra.mxu0 0.0
        %957 = vmatpush.msra.mxu0 0.0
        %958 = vmatpush.msra.mxu0 %v939
        %959 = vmatmul.f32.gmra.mxu0 %v937
        %v960 = vpop.f32.mrf.mxu0
        %v961 = vadd.f32 0.0, %v960
        %962 = vdwg.mxu0
        %963 = vmatpush.msra.mxu0 0.0
        %964 = vmatpush.msra.mxu0 0.0
        %965 = vmatpush.msra.mxu0 0.0
        %966 = vmatpush.msra.mxu0 0.0
        %967 = vmatpush.msra.mxu0 0.0
        %968 = vmatpush.msra.mxu0 0.0
        %969 = vmatpush.msra.mxu0 0.0
        %970 = vmatpush.msra.mxu0 0.0
        %971 = vmatpush.msra.mxu0 0.0
        %972 = vmatpush.msra.mxu0 0.0
        %973 = vmatpush.msra.mxu0 0.0
        %974 = vmatpush.msra.mxu0 0.0
        %975 = vmatpush.msra.mxu0 0.0
        %976 = vmatpush.msra.mxu0 0.0
        %977 = vmatpush.msra.mxu0 0.0
        %978 = vmatpush.msra.mxu0 %v941
        %979 = vmatmul.f32.gmra.mxu0 %v937
        %v980 = vpop.f32.mrf.mxu0
        %v981 = vadd.f32 0.0, %v980
        %982 = vdwg.mxu0
        %v983 = vadd.f32 %v924, %v961
        %v984 = vadd.f32 %v925, %v981
        %985 = vrot.lane.b32.xlu0 %v694, 108
        %v986 = vpop.permute.xlu0 %985
        %987 = vrot.lane.b32.xlu0 %v699, 110
        %v988 = vpop.permute.xlu0 %987
        %989 = vrot.lane.b32.xlu0 %v700, 110
        %v990 = vpop.permute.xlu0 %989
        %991 = vrot.lane.b32.xlu0 %v696, 110
        %v992 = vpop.permute.xlu0 %991
        %vm993 = vcmask 900096
        %v994 = vsel %vm993, %v988, %v990
        %v995 = vsel %vm993, %v990, %v992
        %v996 = vsel %vm714, %v986, 0
        %v998 = vsel %vm717, %v994, 0
        %v1000 = vsel %vm717, %v995, 0
        %1002 = vmatpush.msra.mxu0 0.0
        %1003 = vmatpush.msra.mxu0 0.0
        %1004 = vmatpush.msra.mxu0 0.0
        %1005 = vmatpush.msra.mxu0 0.0
        %1006 = vmatpush.msra.mxu0 0.0
        %1007 = vmatpush.msra.mxu0 0.0
        %1008 = vmatpush.msra.mxu0 0.0
        %1009 = vmatpush.msra.mxu0 0.0
        %1010 = vmatpush.msra.mxu0 0.0
        %1011 = vmatpush.msra.mxu0 0.0
        %1012 = vmatpush.msra.mxu0 0.0
        %1013 = vmatpush.msra.mxu0 0.0
        %1014 = vmatpush.msra.mxu0 0.0
        %1015 = vmatpush.msra.mxu0 0.0
        %1016 = vmatpush.msra.mxu0 0.0
        %1017 = vmatpush.msra.mxu0 %v998
        %1018 = vmatmul.f32.gmra.mxu0 %v996
        %v1019 = vpop.f32.mrf.mxu0
        %v1020 = vadd.f32 0.0, %v1019
        %1021 = vdwg.mxu0
        %1022 = vmatpush.msra.mxu0 0.0
        %1023 = vmatpush.msra.mxu0 0.0
        %1024 = vmatpush.msra.mxu0 0.0
        %1025 = vmatpush.msra.mxu0 0.0
        %1026 = vmatpush.msra.mxu0 0.0
        %1027 = vmatpush.msra.mxu0 0.0
        %1028 = vmatpush.msra.mxu0 0.0
        %1029 = vmatpush.msra.mxu0 0.0
        %1030 = vmatpush.msra.mxu0 0.0
        %1031 = vmatpush.msra.mxu0 0.0
        %1032 = vmatpush.msra.mxu0 0.0
        %1033 = vmatpush.msra.mxu0 0.0
        %1034 = vmatpush.msra.mxu0 0.0
        %1035 = vmatpush.msra.mxu0 0.0
        %1036 = vmatpush.msra.mxu0 0.0
        %1037 = vmatpush.msra.mxu0 %v1000
        %1038 = vmatmul.f32.gmra.mxu0 %v996
        %v1039 = vpop.f32.mrf.mxu0
        %v1040 = vadd.f32 0.0, %v1039
        %1041 = vdwg.mxu0
        %v1042 = vadd.f32 %v983, %v1020
        %v1043 = vadd.f32 %v984, %v1040
        %1044 = vrot.lane.b32.xlu0 %v694, 104
        %v1045 = vpop.permute.xlu0 %1044
        %1046 = vrot.lane.b32.xlu0 %v699, 96
        %v1047 = vpop.permute.xlu0 %1046
        %1048 = vrot.lane.b32.xlu0 %v700, 96
        %v1049 = vpop.permute.xlu0 %1048
        %1050 = vrot.lane.b32.xlu0 %v696, 96
        %v1051 = vpop.permute.xlu0 %1050
        %vm1052 = vcmask 785408
        %v1053 = vsel %vm1052, %v1047, %v1049
        %v1054 = vsel %vm1052, %v1049, %v1051
        %v1055 = vsel %vm714, %v1045, 0
        %v1057 = vsel %vm717, %v1053, 0
        %v1059 = vsel %vm717, %v1054, 0
        %1061 = vmatpush.msra.mxu0 0.0
        %1062 = vmatpush.msra.mxu0 0.0
        %1063 = vmatpush.msra.mxu0 0.0
        %1064 = vmatpush.msra.mxu0 0.0
        %1065 = vmatpush.msra.mxu0 0.0
        %1066 = vmatpush.msra.mxu0 0.0
        %1067 = vmatpush.msra.mxu0 0.0
        %1068 = vmatpush.msra.mxu0 0.0
        %1069 = vmatpush.msra.mxu0 0.0
        %1070 = vmatpush.msra.mxu0 0.0
        %1071 = vmatpush.msra.mxu0 0.0
        %1072 = vmatpush.msra.mxu0 0.0
        %1073 = vmatpush.msra.mxu0 0.0
        %1074 = vmatpush.msra.mxu0 0.0
        %1075 = vmatpush.msra.mxu0 0.0
        %1076 = vmatpush.msra.mxu0 %v1057
        %1077 = vmatmul.f32.gmra.mxu0 %v1055
        %v1078 = vpop.f32.mrf.mxu0
        %v1079 = vadd.f32 0.0, %v1078
        %1080 = vdwg.mxu0
        %1081 = vmatpush.msra.mxu0 0.0
        %1082 = vmatpush.msra.mxu0 0.0
        %1083 = vmatpush.msra.mxu0 0.0
        %1084 = vmatpush.msra.mxu0 0.0
        %1085 = vmatpush.msra.mxu0 0.0
        %1086 = vmatpush.msra.mxu0 0.0
        %1087 = vmatpush.msra.mxu0 0.0
        %1088 = vmatpush.msra.mxu0 0.0
        %1089 = vmatpush.msra.mxu0 0.0
        %1090 = vmatpush.msra.mxu0 0.0
        %1091 = vmatpush.msra.mxu0 0.0
        %1092 = vmatpush.msra.mxu0 0.0
        %1093 = vmatpush.msra.mxu0 0.0
        %1094 = vmatpush.msra.mxu0 0.0
        %1095 = vmatpush.msra.mxu0 0.0
        %1096 = vmatpush.msra.mxu0 %v1059
        %1097 = vmatmul.f32.gmra.mxu0 %v1055
        %v1098 = vpop.f32.mrf.mxu0
        %v1099 = vadd.f32 0.0, %v1098
        %1100 = vdwg.mxu0
        %v1101 = vadd.f32 %v1042, %v1079
        %v1102 = vadd.f32 %v1043, %v1099
        %1103 = vrot.lane.b32.xlu0 %v694, 100
        %v1104 = vpop.permute.xlu0 %1103
        %1105 = vrot.lane.b32.xlu0 %v699, 95
        %v1106 = vpop.permute.xlu0 %1105
        %1107 = vrot.lane.b32.xlu0 %v700, 95
        %v1108 = vpop.permute.xlu0 %1107
        %1109 = vrot.lane.b32.xlu0 %v696, 95
        %v1110 = vpop.permute.xlu0 %1109
        %vm1111 = vcmask 777216
        %v1112 = vsel %vm1111, %v1106, %v1108
        %v1113 = vsel %vm1111, %v1108, %v1110
        %v1114 = vsel %vm714, %v1104, 0
        %v1116 = vsel %vm717, %v1112, 0
        %v1118 = vsel %vm717, %v1113, 0
        %1120 = vmatpush.msra.mxu0 0.0
        %1121 = vmatpush.msra.mxu0 0.0
        %1122 = vmatpush.msra.mxu0 0.0
        %1123 = vmatpush.msra.mxu0 0.0
        %1124 = vmatpush.msra.mxu0 0.0
        %1125 = vmatpush.msra.mxu0 0.0
        %1126 = vmatpush.msra.mxu0 0.0
        %1127 = vmatpush.msra.mxu0 0.0
        %1128 = vmatpush.msra.mxu0 0.0
        %1129 = vmatpush.msra.mxu0 0.0
        %1130 = vmatpush.msra.mxu0 0.0
        %1131 = vmatpush.msra.mxu0 0.0
        %1132 = vmatpush.msra.mxu0 0.0
        %1133 = vmatpush.msra.mxu0 0.0
        %1134 = vmatpush.msra.mxu0 0.0
        %1135 = vmatpush.msra.mxu0 %v1116
        %1136 = vmatmul.f32.gmra.mxu0 %v1114
        %v1137 = vpop.f32.mrf.mxu0
        %v1138 = vadd.f32 0.0, %v1137
        %1139 = vdwg.mxu0
        %1140 = vmatpush.msra.mxu0 0.0
        %1141 = vmatpush.msra.mxu0 0.0
        %1142 = vmatpush.msra.mxu0 0.0
        %1143 = vmatpush.msra.mxu0 0.0
        %1144 = vmatpush.msra.mxu0 0.0
        %1145 = vmatpush.msra.mxu0 0.0
        %1146 = vmatpush.msra.mxu0 0.0
        %1147 = vmatpush.msra.mxu0 0.0
        %1148 = vmatpush.msra.mxu0 0.0
        %1149 = vmatpush.msra.mxu0 0.0
        %1150 = vmatpush.msra.mxu0 0.0
        %1151 = vmatpush.msra.mxu0 0.0
        %1152 = vmatpush.msra.mxu0 0.0
        %1153 = vmatpush.msra.mxu0 0.0
        %1154 = vmatpush.msra.mxu0 0.0
        %1155 = vmatpush.msra.mxu0 %v1118
        %1156 = vmatmul.f32.gmra.mxu0 %v1114
        %v1157 = vpop.f32.mrf.mxu0
        %v1158 = vadd.f32 0.0, %v1157
        %1159 = vdwg.mxu0
        %v1160 = vadd.f32 %v1101, %v1138
        %v1161 = vadd.f32 %v1102, %v1158
        %1162 = vrot.lane.b32.xlu0 %v694, 96
        %v1163 = vpop.permute.xlu0 %1162
        %1164 = vrot.lane.b32.xlu0 %v699, 94
        %v1165 = vpop.permute.xlu0 %1164
        %1166 = vrot.lane.b32.xlu0 %v700, 94
        %v1167 = vpop.permute.xlu0 %1166
        %1168 = vrot.lane.b32.xlu0 %v696, 94
        %v1169 = vpop.permute.xlu0 %1168
        %vm1170 = vcmask 769024
        %v1171 = vsel %vm1170, %v1165, %v1167
        %v1172 = vsel %vm1170, %v1167, %v1169
        %v1173 = vsel %vm714, %v1163, 0
        %v1175 = vsel %vm717, %v1171, 0
        %v1177 = vsel %vm717, %v1172, 0
        %1179 = vmatpush.msra.mxu0 0.0
        %1180 = vmatpush.msra.mxu0 0.0
        %1181 = vmatpush.msra.mxu0 0.0
        %1182 = vmatpush.msra.mxu0 0.0
        %1183 = vmatpush.msra.mxu0 0.0
        %1184 = vmatpush.msra.mxu0 0.0
        %1185 = vmatpush.msra.mxu0 0.0
        %1186 = vmatpush.msra.mxu0 0.0
        %1187 = vmatpush.msra.mxu0 0.0
        %1188 = vmatpush.msra.mxu0 0.0
        %1189 = vmatpush.msra.mxu0 0.0
        %1190 = vmatpush.msra.mxu0 0.0
        %1191 = vmatpush.msra.mxu0 0.0
        %1192 = vmatpush.msra.mxu0 0.0
        %1193 = vmatpush.msra.mxu0 0.0
        %1194 = vmatpush.msra.mxu0 %v1175
        %1195 = vmatmul.f32.gmra.mxu0 %v1173
        %v1196 = vpop.f32.mrf.mxu0
        %v1197 = vadd.f32 0.0, %v1196
        %1198 = vdwg.mxu0
        %1199 = vmatpush.msra.mxu0 0.0
        %1200 = vmatpush.msra.mxu0 0.0
        %1201 = vmatpush.msra.mxu0 0.0
        %1202 = vmatpush.msra.mxu0 0.0
        %1203 = vmatpush.msra.mxu0 0.0
        %1204 = vmatpush.msra.mxu0 0.0
        %1205 = vmatpush.msra.mxu0 0.0
        %1206 = vmatpush.msra.mxu0 0.0
        %1207 = vmatpush.msra.mxu0 0.0
        %1208 = vmatpush.msra.mxu0 0.0
        %1209 = vmatpush.msra.mxu0 0.0
        %1210 = vmatpush.msra.mxu0 0.0
        %1211 = vmatpush.msra.mxu0 0.0
        %1212 = vmatpush.msra.mxu0 0.0
        %1213 = vmatpush.msra.mxu0 0.0
        %1214 = vmatpush.msra.mxu0 %v1177
        %1215 = vmatmul.f32.gmra.mxu0 %v1173
        %v1216 = vpop.f32.mrf.mxu0
        %v1217 = vadd.f32 0.0, %v1216
        %1218 = vdwg.mxu0
        %v1219 = vadd.f32 %v1160, %v1197
        %v1220 = vadd.f32 %v1161, %v1217
        %v1223 = vrot.slane %v1220, 4
        %v1224 = vsel %vm717, %v1219, %v1223
        %1226 = vst [vmem:[%s505] sm:$0x77] %v1224
        %s1227 = smul.u32 2, %s30
        %p1228 = scmp.lt.s32.totalorder %s29, 1
        %s1229 = scalar_select %p1228, %s29, 1
        %p1230 = scmp.lt.s32.totalorder %s1227, 1
        %s1231 = scalar_select %p1230, %s1227, 1
        %s1232 = smul.addr %s1229, 2
        %s1233 = sadd.s32 %s1231, %s1232
        %s1234 = smul.addr %s1233, 4
        %s1235 = scalar_lea.vmem %s9, %s1234
        // Predicated region
        $region85: #{tpu_custom_call.1} parent=55 // pred_check
          %p1236 = pneg %p269
        $region86: #{tpu_custom_call.1} parent=55 // pred_check_branch
          %1238 = sbr.rel (%p1236) target = $region88
        $region87: #{tpu_custom_call.1} parent=55 // pred_region
          %s1239 = smul.u32 2, %s30
        $region88: #{tpu_custom_call.1} parent=55 // pred_fallthru
          _
      $region56: #{tpu_custom_call.1} parent=5 // pred_fallthru
        _
      %p1240 = scmp.le.s32.totalorder 2, %s20
      // Predicated region
      $region89: #{tpu_custom_call.1} parent=5 // pred_check
        %p1241 = pneg %p1240
      $region90: #{tpu_custom_call.1} parent=5 // pred_check_branch
        %1243 = sbr.rel (%p1241) target = $region92
      $region91: #{tpu_custom_call.1} parent=5 // pred_region
        %s1244 = ssub.s32 %s20, 2
        // Predicated region
        $region93: #{tpu_custom_call.1} parent=91 // pred_check
          %p1245 = pneg %p275
        $region94: #{tpu_custom_call.1} parent=91 // pred_check_branch
          %1247 = sbr.rel (%p1245) target = $region96
        $region95: #{tpu_custom_call.1} parent=91 // pred_region
          %s1248 = smul.u32 2, %s32
          %p1249 = scmp.lt.s32.totalorder %s31, 1
          %s1250 = scalar_select %p1249, %s31, 1
          %p1251 = scmp.lt.s32.totalorder %s1248, 1
          %s1252 = scalar_select %p1251, %s1248, 1
          %s1253 = smul.addr %s1250, 2
          %s1254 = sadd.s32 %s1252, %s1253
          %s1255 = smul.addr %s1254, 4
          %s1256 = scalar_lea.vmem %s9, %s1255
        $region96: #{tpu_custom_call.1} parent=91 // pred_fallthru
          _
      $region92: #{tpu_custom_call.1} parent=5 // pred_fallthru
        _
    $region6: #{tpu_custom_call.1} parent=1 // loop_footer
      %s24 = sadd.s32 1, %s20
    $region7: #{tpu_custom_call.1} parent=1 // loop_footer_branch
      %19 = sbr.rel target = $region3
    $region8: #{tpu_custom_call.1} parent=1 // loop_exit
      _
    %1257 = vsyncpa [#allocation4], 1
    %s1258 = scalar_lea.sflag [#allocation4], 1
    %1259 = vsyncpa %s1258, 1
    %1260 = vsyncpa [#allocation6], 1
    %1261 = vsyncpa [#allocation9], 1

</llo_original>
